<compile_context>
chip_gen: v7x
topology: tpu7x:2x2x1
jax: 0.10.0
libtpu: 0.0.40
codegen_flags: <defaults>
</compile_context>

<pallas_src>
import math

import jax
import jax.numpy as jnp
from jax.experimental import pallas as pl
from jax.experimental.pallas import tpu as pltpu


NUM_LOOPS = 1
IN_FEATURES = 2 + 4 * NUM_LOOPS          # 6
F0, F1 = 256, 512                        # hidden widths
OUT_FEATURES = 1
TILE_B = 2048                            # batch tile (lane dim; multiple of 128). Sweep 2048-4096.


def _round_up(n, m):
    return ((n + m - 1) // m) * m


def mlp_kernel(xt_ref, w1_ref, b1_ref, w2_ref, b2_ref, w3_ref, b3_ref, o_ref):
    # xt_ref: [6, TILE_B] f32 (batch on lanes). Cast to bf16 in-kernel (cheap VPU pack,
    # avoids a standalone XLA cast kernel + extra HBM round trip in the wrapper).
    xt = xt_ref[...].astype(jnp.bfloat16)

    # Layer 1: [256,6] x [6,TILE_B] -> [256,TILE_B], f32 accumulate, bias+ReLU in f32.
    h1 = jnp.dot(w1_ref[...], xt, preferred_element_type=jnp.float32) + b1_ref[...]
    h1 = jnp.maximum(h1, 0.0).astype(jnp.bfloat16)

    # Layer 2 (dominant matmul): [512,256] x [256,TILE_B] -> [512,TILE_B].
    h2 = jnp.dot(w2_ref[...], h1, preferred_element_type=jnp.float32) + b2_ref[...]
    h2 = jnp.maximum(h2, 0.0).astype(jnp.bfloat16)

    # Layer 3 (out_features = 1) on the MXU: [1,512] x [512,TILE_B] -> [1,TILE_B].
    # Result is lane-dense -> unmasked stores, contiguous output DMA.
    o = jnp.dot(w3_ref[...], h2, preferred_element_type=jnp.float32) + b3_ref[...]
    o_ref[...] = o


def reductive_model_forward(x, params, tile_b=TILE_B):
    """x: [B, IN_FEATURES] float32 -> [B, 1] float32."""
    w1, b1, w2, b2, w3, b3 = params       # PyTorch layout: w (out, in), b (out,)
    B = x.shape[0]

    # Adaptive tile: multiple of 128 (lane dim), capped at TILE_B; for medium B,
    # target >= 2 tiles so v7x's two TensorCores both get work on the "parallel" axis.
    tile = min(tile_b, max(128, _round_up(pl.cdiv(B, 2), 128)))
    num_tiles = pl.cdiv(B, tile)
    Bp = num_tiles * tile

    # Pad batch + transpose to feature-major [6, Bp]; keep f32 (cast happens in-kernel).
    xt = jnp.pad(x, ((0, Bp - B), (0, 0))).T

    # Small, VMEM-resident parameters: bf16 weights (MXU), f32 biases as columns.
    w1b = w1.astype(jnp.bfloat16)                       # [256, 6]
    w2b = w2.astype(jnp.bfloat16)                       # [512, 256]
    w3b = w3.reshape(OUT_FEATURES, F1).astype(jnp.bfloat16)  # [1, 512]
    b1c = b1.reshape(F0, 1).astype(jnp.float32)
    b2c = b2.reshape(F1, 1).astype(jnp.float32)
    b3c = b3.reshape(1, 1).astype(jnp.float32)

    flops = 2 * Bp * (IN_FEATURES * F0 + F0 * F1 + F1 * OUT_FEATURES)
    bytes_accessed = (
        Bp * IN_FEATURES * 4 + Bp * OUT_FEATURES * 4
        + (F0 * IN_FEATURES + F1 * F0 + F1 * OUT_FEATURES) * 2
        + (F0 + F1 + 1) * 4
    )

    out = pl.pallas_call(
        mlp_kernel,
        out_shape=jax.ShapeDtypeStruct((1, Bp), jnp.float32),
        grid_spec=pltpu.PrefetchScalarGridSpec(
            num_scalar_prefetch=0,
            grid=(num_tiles,),
            in_specs=[
                # x^T: one lane-dense batch tile per step (pipelined HBM<->VMEM DMA).
                pl.BlockSpec((IN_FEATURES, tile), lambda i: (0, i)),
                # Weights / biases: same block every step -> VMEM-resident.
                pl.BlockSpec((F0, IN_FEATURES), lambda i: (0, 0)),
                pl.BlockSpec((F0, 1), lambda i: (0, 0)),
                pl.BlockSpec((F1, F0), lambda i: (0, 0)),
                pl.BlockSpec((F1, 1), lambda i: (0, 0)),
                pl.BlockSpec((OUT_FEATURES, F1), lambda i: (0, 0)),
                pl.BlockSpec((1, 1), lambda i: (0, 0)),
            ],
            # Lane-dense output: [1, tile] row per step of a [1, Bp] array.
            out_specs=pl.BlockSpec((1, tile), lambda i: (0, i)),
        ),
        compiler_params=pltpu.CompilerParams(
            dimension_semantics=("parallel",),   # shard batch tiles across TCs on v7x
            vmem_limit_bytes=32 << 20,           # headroom for TILE_B up to ~4096 on v5e
        ),
        cost_estimate=pl.CostEstimate(
            flops=flops, transcendentals=0, bytes_accessed=bytes_accessed
        ),
    )(xt, w1b, b1c, w2b, b2c, w3b, b3c)

    return out[0, :B].reshape(B, OUT_FEATURES)


def xavier_uniform(key, fan_out, fan_in):
    # torch.nn.init.xavier_uniform_ on a (out, in) weight.
    bound = math.sqrt(6.0 / (fan_in + fan_out))
    return jax.random.uniform(
        key, (fan_out, fan_in), dtype=jnp.float32, minval=-bound, maxval=bound
    )


def linear_bias(key, fan_in, fan_out):
    # PyTorch Linear default bias init: U(-1/sqrt(fan_in), 1/sqrt(fan_in)).
    bound = 1.0 / math.sqrt(fan_in)
    return jax.random.uniform(
        key, (fan_out,), dtype=jnp.float32, minval=-bound, maxval=bound
    )


def init_params(key):
    k = jax.random.split(key, 6)
    w1 = xavier_uniform(k[0], F0, IN_FEATURES)
    b1 = linear_bias(k[1], IN_FEATURES, F0)
    w2 = xavier_uniform(k[2], F1, F0)
    b2 = linear_bias(k[3], F0, F1)
    w3 = xavier_uniform(k[4], OUT_FEATURES, F1)
    b3 = linear_bias(k[5], F1, OUT_FEATURES)
    return (w1, b1, w2, b2, w3, b3)


def reference_forward(x, params):
    # Same numerics as the kernel: bf16 inputs/weights at every matmul, f32 accumulate.
    w1, b1, w2, b2, w3, b3 = params
    xb = x.astype(jnp.bfloat16)
    h1 = jnp.dot(xb, w1.astype(jnp.bfloat16).T, preferred_element_type=jnp.float32) + b1
    h1 = jnp.maximum(h1, 0.0)
    h2 = jnp.dot(h1.astype(jnp.bfloat16), w2.astype(jnp.bfloat16).T,
                 preferred_element_type=jnp.float32) + b2
    h2 = jnp.maximum(h2, 0.0)
    o = jnp.dot(h2.astype(jnp.bfloat16), w3.astype(jnp.bfloat16).T,
                preferred_element_type=jnp.float32) + b3
    return o


if __name__ == "__main__":
    key = jax.random.PRNGKey(0)
    kx, kp = jax.random.split(key)

    batch = 8
    x = jax.random.normal(kx, (batch, IN_FEATURES), dtype=jnp.float32)
    params = init_params(kp)

    out = reductive_model_forward(x, params)
    out = jax.block_until_ready(out)

    ref = reference_forward(x, params)
    assert out.shape == (batch, OUT_FEATURES)
    assert jnp.allclose(out, ref, atol=1e-2, rtol=1e-2), (
        f"max abs diff {jnp.max(jnp.abs(out - ref))}"
    )

    print("KERNEL_OK")
</pallas_src>

<mosaic_0001>
module attributes {stable_mosaic.version = 11 : i64} {
  func.func @mlp_kernel(%arg0: i32, %arg1: memref<6x128xf32, #tpu.memory_space<vmem>>, %arg2: memref<256x6xbf16, #tpu.memory_space<vmem>>, %arg3: memref<256x1xf32, #tpu.memory_space<vmem>>, %arg4: memref<512x256xbf16, #tpu.memory_space<vmem>>, %arg5: memref<512x1xf32, #tpu.memory_space<vmem>>, %arg6: memref<1x512xbf16, #tpu.memory_space<vmem>>, %arg7: memref<1x1xf32, #tpu.memory_space<vmem>>, %arg8: memref<1x128xf32, #tpu.memory_space<vmem>>) attributes {dimension_semantics = [#tpu.dimension_semantics<parallel>], iteration_bounds = array<i64: 1>, scalar_prefetch = 0 : i64, scratch_operands = 0 : i64, tpu.core_type = #tpu.core_type<tc>, window_params = [{transform_indices = @transform_0, window_bounds = array<i64: 6, 128>}, {pipeline_mode = #tpu.pipeline_mode<synchronous>, transform_indices = @transform_1, window_bounds = array<i64: 256, 6>}, {pipeline_mode = #tpu.pipeline_mode<synchronous>, transform_indices = @transform_2, window_bounds = array<i64: 256, 1>}, {pipeline_mode = #tpu.pipeline_mode<synchronous>, transform_indices = @transform_3, window_bounds = array<i64: 512, 256>}, {pipeline_mode = #tpu.pipeline_mode<synchronous>, transform_indices = @transform_4, window_bounds = array<i64: 512, 1>}, {pipeline_mode = #tpu.pipeline_mode<synchronous>, transform_indices = @transform_5, window_bounds = array<i64: 1, 512>}, {pipeline_mode = #tpu.pipeline_mode<synchronous>, transform_indices = @transform_6, window_bounds = array<i64: 1, 1>}, {transform_indices = @transform_7, window_bounds = array<i64: 1, 128>}]} {
    %c0 = arith.constant 0 : index
    %c0_0 = arith.constant 0 : index
    %0 = vector.load %arg1[%c0, %c0_0] : memref<6x128xf32, #tpu.memory_space<vmem>>, vector<6x128xf32>
    %1 = arith.truncf %0 : vector<6x128xf32> to vector<6x128xbf16>
    %c0_1 = arith.constant 0 : index
    %c0_2 = arith.constant 0 : index
    %2 = vector.load %arg2[%c0_1, %c0_2] : memref<256x6xbf16, #tpu.memory_space<vmem>>, vector<256x6xbf16>
    %cst = arith.constant dense<0.000000e+00> : vector<256x128xf32>
    %3 = tpu.matmul %2, %1, %cst {dimension_numbers = #tpu.dot_dimension_numbers<[1], [0], [0], [1], [0, 0, 1, 1], [], []>} : vector<256x6xbf16>, vector<6x128xbf16>, vector<256x128xf32> -> vector<256x128xf32>
    %c0_3 = arith.constant 0 : index
    %c0_4 = arith.constant 0 : index
    %4 = vector.load %arg3[%c0_3, %c0_4] : memref<256x1xf32, #tpu.memory_space<vmem>>, vector<256x1xf32>
    %5 = vector.broadcast %4 : vector<256x1xf32> to vector<256x128xf32>
    %6 = arith.addf %3, %5 : vector<256x128xf32>
    %cst_5 = arith.constant 0.000000e+00 : f32
    %7 = vector.broadcast %cst_5 : f32 to vector<256x128xf32>
    %8 = arith.maximumf %6, %7 : vector<256x128xf32>
    %9 = arith.truncf %8 : vector<256x128xf32> to vector<256x128xbf16>
    %c0_6 = arith.constant 0 : index
    %c0_7 = arith.constant 0 : index
    %10 = vector.load %arg4[%c0_6, %c0_7] : memref<512x256xbf16, #tpu.memory_space<vmem>>, vector<512x256xbf16>
    %cst_8 = arith.constant dense<0.000000e+00> : vector<512x128xf32>
    %11 = tpu.matmul %10, %9, %cst_8 {dimension_numbers = #tpu.dot_dimension_numbers<[1], [0], [0], [1], [0, 0, 1, 1], [], []>} : vector<512x256xbf16>, vector<256x128xbf16>, vector<512x128xf32> -> vector<512x128xf32>
    %c0_9 = arith.constant 0 : index
    %c0_10 = arith.constant 0 : index
    %12 = vector.load %arg5[%c0_9, %c0_10] : memref<512x1xf32, #tpu.memory_space<vmem>>, vector<512x1xf32>
    %13 = vector.broadcast %12 : vector<512x1xf32> to vector<512x128xf32>
    %14 = arith.addf %11, %13 : vector<512x128xf32>
    %cst_11 = arith.constant 0.000000e+00 : f32
    %15 = vector.broadcast %cst_11 : f32 to vector<512x128xf32>
    %16 = arith.maximumf %14, %15 : vector<512x128xf32>
    %17 = arith.truncf %16 : vector<512x128xf32> to vector<512x128xbf16>
    %c0_12 = arith.constant 0 : index
    %c0_13 = arith.constant 0 : index
    %18 = vector.load %arg6[%c0_12, %c0_13] : memref<1x512xbf16, #tpu.memory_space<vmem>>, vector<1x512xbf16>
    %cst_14 = arith.constant dense<0.000000e+00> : vector<1x128xf32>
    %19 = tpu.matmul %18, %17, %cst_14 {dimension_numbers = #tpu.dot_dimension_numbers<[1], [0], [0], [1], [0, 0, 1, 1], [], []>} : vector<1x512xbf16>, vector<512x128xbf16>, vector<1x128xf32> -> vector<1x128xf32>
    %c0_15 = arith.constant 0 : index
    %c0_16 = arith.constant 0 : index
    %20 = vector.load %arg7[%c0_15, %c0_16] : memref<1x1xf32, #tpu.memory_space<vmem>>, vector<1x1xf32>
    %21 = vector.broadcast %20 : vector<1x1xf32> to vector<1x128xf32>
    %22 = arith.addf %19, %21 : vector<1x128xf32>
    %c0_17 = arith.constant 0 : index
    %c0_18 = arith.constant 0 : index
    %23 = vector.load %arg8[%c0_17, %c0_18] : memref<1x128xf32, #tpu.memory_space<vmem>>, vector<1x128xf32>
    tpu.vector_store %arg8[%c0_17, %c0_18], %22 {strides = array<i32>} : memref<1x128xf32, #tpu.memory_space<vmem>>, vector<1x128xf32>,
    return
  }
  func.func @transform_0(%arg0: i32) -> (i32, i32) {
    %c0_i32 = arith.constant 0 : i32
    %c0_i32_0 = arith.constant 0 : i32
    return %c0_i32, %arg0 : i32, i32
  }
  func.func @transform_1(%arg0: i32) -> (i32, i32) {
    %c0_i32 = arith.constant 0 : i32
    %c0_i32_0 = arith.constant 0 : i32
    %c0_i32_1 = arith.constant 0 : i32
    return %c0_i32, %c0_i32_0 : i32, i32
  }
  func.func @transform_2(%arg0: i32) -> (i32, i32) {
    %c0_i32 = arith.constant 0 : i32
    %c0_i32_0 = arith.constant 0 : i32
    %c0_i32_1 = arith.constant 0 : i32
    return %c0_i32, %c0_i32_0 : i32, i32
  }
  func.func @transform_3(%arg0: i32) -> (i32, i32) {
    %c0_i32 = arith.constant 0 : i32
    %c0_i32_0 = arith.constant 0 : i32
    %c0_i32_1 = arith.constant 0 : i32
    return %c0_i32, %c0_i32_0 : i32, i32
  }
  func.func @transform_4(%arg0: i32) -> (i32, i32) {
    %c0_i32 = arith.constant 0 : i32
    %c0_i32_0 = arith.constant 0 : i32
    %c0_i32_1 = arith.constant 0 : i32
    return %c0_i32, %c0_i32_0 : i32, i32
  }
  func.func @transform_5(%arg0: i32) -> (i32, i32) {
    %c0_i32 = arith.constant 0 : i32
    %c0_i32_0 = arith.constant 0 : i32
    %c0_i32_1 = arith.constant 0 : i32
    return %c0_i32, %c0_i32_0 : i32, i32
  }
  func.func @transform_6(%arg0: i32) -> (i32, i32) {
    %c0_i32 = arith.constant 0 : i32
    %c0_i32_0 = arith.constant 0 : i32
    %c0_i32_1 = arith.constant 0 : i32
    return %c0_i32, %c0_i32_0 : i32, i32
  }
  func.func @transform_7(%arg0: i32) -> (i32, i32) {
    %c0_i32 = arith.constant 0 : i32
    %c0_i32_0 = arith.constant 0 : i32
    return %c0_i32, %arg0 : i32, i32
  }
}

</mosaic_0001>

<llo_original>
// kernel: tpu_custom_call.1
$region0: #{tpu_custom_call.1}
  #allocation0 [shape = 'u32[]', space=smem, size = 0x4, offset = 0x4, fixed_abs, tag = 'smem constant byte address 0x4 - core index']
  #allocation1 [shape = 'u32[144,128]{1,0:T(1,128)}', space=vmem, size = 0x12000, scoped, tag = 'internal scratch']
  #allocation2 [shape = 'f32[1,1]{1,0:T(1,128)S(1)}', space=vmem, size = 0x200, scoped, tag = 'scoped memory for tpu_custom_call.1']
  %s0 = inlined_call_operand.vmem [shape: f32[6,128], index: 0, kind: input, shape index: {}]
  %s1 = inlined_call_operand.vmem [shape: bf16[256,6], index: 1, kind: input, shape index: {}]
  %s2 = inlined_call_operand.vmem [shape: f32[256,1], index: 2, kind: input, shape index: {}]
  %s3 = inlined_call_operand.vmem [shape: bf16[512,256], index: 3, kind: input, shape index: {}]
  %s4 = inlined_call_operand.vmem [shape: f32[512,1], index: 4, kind: input, shape index: {}]
  %s5 = inlined_call_operand.vmem [shape: bf16[1,512], index: 5, kind: input, shape index: {}]
  %s6 = inlined_call_operand.<no memory space> [shape: f32[1,1], index: 6, kind: input, shape index: {}]
  %s7 = inlined_call_operand.hbm [shape: f32[1,128], index: 7, kind: output, shape index: {}]
  %s8 = sld [smem:[#allocation0]]
  $region38: #{tpu_custom_call.1} parent=0
    _
  %s10 = ssub.s32 1, %s8
  %s11 = scalar_select 0, %s10, %s8
  %v12 = vstv %s6
  %13 = vst [vmem:[#allocation2] sm:$0x1] %v12
  $region1: #{tpu_custom_call.1} parent=0
    #allocation3 [shape = 'u8[512]{0}', space=vmem, size = 0x400, scoped, tag = 'output window, operand 0, single buffered']
    #allocation4 [shape = 's32[1]{0}', space=sflag, size = 0x4, scoped, tag = 'scoped memory for tpu_custom_call.1']
    %14 = vsyncpa [#allocation4], 0
    // Predicated region
    $region2: #{tpu_custom_call.1} parent=1 // pred_check
      _
    $region3: #{tpu_custom_call.1} parent=1 // pred_check_branch
      %16 = sbr.rel (0) target = $region5
    $region4: #{tpu_custom_call.1} parent=1 // pred_region
      _
    $region5: #{tpu_custom_call.1} parent=1 // pred_fallthru
      _
    // Predicated region
    $region6: #{tpu_custom_call.1} parent=1 // pred_check
      _
    $region7: #{tpu_custom_call.1} parent=1 // pred_check_branch
      %18 = sbr.rel (0) target = $region9
    $region8: #{tpu_custom_call.1} parent=1 // pred_region
      _
    $region9: #{tpu_custom_call.1} parent=1 // pred_fallthru
      _
    // Predicated region
    $region10: #{tpu_custom_call.1} parent=1 // pred_check
      _
    $region11: #{tpu_custom_call.1} parent=1 // pred_check_branch
      %20 = sbr.rel (0) target = $region13
    $region12: #{tpu_custom_call.1} parent=1 // pred_region
      _
    $region13: #{tpu_custom_call.1} parent=1 // pred_fallthru
      _
    // Predicated region
    $region14: #{tpu_custom_call.1} parent=1 // pred_check
      _
    $region15: #{tpu_custom_call.1} parent=1 // pred_check_branch
      %22 = sbr.rel (0) target = $region17
    $region16: #{tpu_custom_call.1} parent=1 // pred_region
      _
    $region17: #{tpu_custom_call.1} parent=1 // pred_fallthru
      _
    // Predicated region
    $region18: #{tpu_custom_call.1} parent=1 // pred_check
      _
    $region19: #{tpu_custom_call.1} parent=1 // pred_check_branch
      %24 = sbr.rel (0) target = $region21
    $region20: #{tpu_custom_call.1} parent=1 // pred_region
      _
    $region21: #{tpu_custom_call.1} parent=1 // pred_fallthru
      _
    // Predicated region
    $region22: #{tpu_custom_call.1} parent=1 // pred_check
      _
    $region23: #{tpu_custom_call.1} parent=1 // pred_check_branch
      %26 = sbr.rel (0) target = $region25
    $region24: #{tpu_custom_call.1} parent=1 // pred_region
      _
    $region25: #{tpu_custom_call.1} parent=1 // pred_fallthru
      _
    // Predicated region
    $region26: #{tpu_custom_call.1} parent=1 // pred_check
      _
    $region27: #{tpu_custom_call.1} parent=1 // pred_check_branch
      %28 = sbr.rel (0) target = $region29
    $region28: #{tpu_custom_call.1} parent=1 // pred_region
      _
    $region29: #{tpu_custom_call.1} parent=1 // pred_fallthru
      _
    %v30 = vld [vmem:[%s0] sm:$0x3f]
    %v31 = vpack.c.bf16 %v30, %v30
    %v32 = vld [vmem:[%s1] sm:$0xf]
    %v33 = vld [vmem:[%s1 + $0x4] sm:$0xf]
    %v34 = vld [vmem:[%s1 + $0x8] sm:$0xf]
    %v35 = vld [vmem:[%s1 + $0xc] sm:$0xf]
    %v36 = vld [vmem:[%s1 + $0x10] sm:$0xf]
    %v37 = vld [vmem:[%s1 + $0x14] sm:$0xf]
    %v38 = vld [vmem:[%s1 + $0x18] sm:$0xf]
    %v39 = vld [vmem:[%s1 + $0x1c] sm:$0xf]
    %v40 = vld [vmem:[%s1 + $0x20] sm:$0xf]
    %v41 = vld [vmem:[%s1 + $0x24] sm:$0xf]
    %v42 = vld [vmem:[%s1 + $0x28] sm:$0xf]
    %v43 = vld [vmem:[%s1 + $0x2c] sm:$0xf]
    %v44 = vld [vmem:[%s1 + $0x30] sm:$0xf]
    %v45 = vld [vmem:[%s1 + $0x34] sm:$0xf]
    %v46 = vld [vmem:[%s1 + $0x38] sm:$0xf]
    %v47 = vld [vmem:[%s1 + $0x3c] sm:$0xf]
    %v48 = vld [vmem:[%s1 + $0x40] sm:$0xf]
    %v49 = vld [vmem:[%s1 + $0x44] sm:$0xf]
    %v50 = vld [vmem:[%s1 + $0x48] sm:$0xf]
    %v51 = vld [vmem:[%s1 + $0x4c] sm:$0xf]
    %v52 = vld [vmem:[%s1 + $0x50] sm:$0xf]
    %v53 = vld [vmem:[%s1 + $0x54] sm:$0xf]
    %v54 = vld [vmem:[%s1 + $0x58] sm:$0xf]
    %v55 = vld [vmem:[%s1 + $0x5c] sm:$0xf]
    %v56 = vld [vmem:[%s1 + $0x60] sm:$0xf]
    %v57 = vld [vmem:[%s1 + $0x64] sm:$0xf]
    %v58 = vld [vmem:[%s1 + $0x68] sm:$0xf]
    %v59 = vld [vmem:[%s1 + $0x6c] sm:$0xf]
    %v60 = vld [vmem:[%s1 + $0x70] sm:$0xf]
    %v61 = vld [vmem:[%s1 + $0x74] sm:$0xf]
    %v62 = vld [vmem:[%s1 + $0x78] sm:$0xf]
    %v63 = vld [vmem:[%s1 + $0x7c] sm:$0xf]
    %v64 = vld [vmem:[%s2] sm:$0xff]
    %v65 = vld [vmem:[%s2 + $0x8] sm:$0xff]
    %v66 = vld [vmem:[%s2 + $0x10] sm:$0xff]
    %v67 = vld [vmem:[%s2 + $0x18] sm:$0xff]
    %v68 = vld [vmem:[%s2 + $0x20] sm:$0xff]
    %v69 = vld [vmem:[%s2 + $0x28] sm:$0xff]
    %v70 = vld [vmem:[%s2 + $0x30] sm:$0xff]
    %v71 = vld [vmem:[%s2 + $0x38] sm:$0xff]
    %v72 = vld [vmem:[%s2 + $0x40] sm:$0xff]
    %v73 = vld [vmem:[%s2 + $0x48] sm:$0xff]
    %v74 = vld [vmem:[%s2 + $0x50] sm:$0xff]
    %v75 = vld [vmem:[%s2 + $0x58] sm:$0xff]
    %v76 = vld [vmem:[%s2 + $0x60] sm:$0xff]
    %v77 = vld [vmem:[%s2 + $0x68] sm:$0xff]
    %v78 = vld [vmem:[%s2 + $0x70] sm:$0xff]
    %v79 = vld [vmem:[%s2 + $0x78] sm:$0xff]
    %v80 = vld [vmem:[%s2 + $0x80] sm:$0xff]
    %v81 = vld [vmem:[%s2 + $0x88] sm:$0xff]
    %v82 = vld [vmem:[%s2 + $0x90] sm:$0xff]
    %v83 = vld [vmem:[%s2 + $0x98] sm:$0xff]
    %v84 = vld [vmem:[%s2 + $0xa0] sm:$0xff]
    %v85 = vld [vmem:[%s2 + $0xa8] sm:$0xff]
    %v86 = vld [vmem:[%s2 + $0xb0] sm:$0xff]
    %v87 = vld [vmem:[%s2 + $0xb8] sm:$0xff]
    %v88 = vld [vmem:[%s2 + $0xc0] sm:$0xff]
    %v89 = vld [vmem:[%s2 + $0xc8] sm:$0xff]
    %v90 = vld [vmem:[%s2 + $0xd0] sm:$0xff]
    %v91 = vld [vmem:[%s2 + $0xd8] sm:$0xff]
    %v92 = vld [vmem:[%s2 + $0xe0] sm:$0xff]
    %v93 = vld [vmem:[%s2 + $0xe8] sm:$0xff]
    %v94 = vld [vmem:[%s2 + $0xf0] sm:$0xff]
    %v95 = vld [vmem:[%s2 + $0xf8] sm:$0xff]
    %97 = vset.pattern.permute.xlu0 0
    %98 = vperm.xlu0 %97, %v64
    %v99 = vpop.permute.xlu0 %98
    %102 = vset.pattern.permute.xlu0 0
    %103 = vperm.xlu0 %102, %v65
    %v104 = vpop.permute.xlu0 %103
    %107 = vset.pattern.permute.xlu0 0
    %108 = vperm.xlu0 %107, %v66
    %v109 = vpop.permute.xlu0 %108
    %112 = vset.pattern.permute.xlu0 0
    %113 = vperm.xlu0 %112, %v67
    %v114 = vpop.permute.xlu0 %113
    %117 = vset.pattern.permute.xlu0 0
    %118 = vperm.xlu0 %117, %v68
    %v119 = vpop.permute.xlu0 %118
    %122 = vset.pattern.permute.xlu0 0
    %123 = vperm.xlu0 %122, %v69
    %v124 = vpop.permute.xlu0 %123
    %127 = vset.pattern.permute.xlu0 0
    %128 = vperm.xlu0 %127, %v70
    %v129 = vpop.permute.xlu0 %128
    %132 = vset.pattern.permute.xlu0 0
    %133 = vperm.xlu0 %132, %v71
    %v134 = vpop.permute.xlu0 %133
    %137 = vset.pattern.permute.xlu0 0
    %138 = vperm.xlu0 %137, %v72
    %v139 = vpop.permute.xlu0 %138
    %142 = vset.pattern.permute.xlu0 0
    %143 = vperm.xlu0 %142, %v73
    %v144 = vpop.permute.xlu0 %143
    %147 = vset.pattern.permute.xlu0 0
    %148 = vperm.xlu0 %147, %v74
    %v149 = vpop.permute.xlu0 %148
    %152 = vset.pattern.permute.xlu0 0
    %153 = vperm.xlu0 %152, %v75
    %v154 = vpop.permute.xlu0 %153
    %157 = vset.pattern.permute.xlu0 0
    %158 = vperm.xlu0 %157, %v76
    %v159 = vpop.permute.xlu0 %158
    %162 = vset.pattern.permute.xlu0 0
    %163 = vperm.xlu0 %162, %v77
    %v164 = vpop.permute.xlu0 %163
    %167 = vset.pattern.permute.xlu0 0
    %168 = vperm.xlu0 %167, %v78
    %v169 = vpop.permute.xlu0 %168
    %172 = vset.pattern.permute.xlu0 0
    %173 = vperm.xlu0 %172, %v79
    %v174 = vpop.permute.xlu0 %173
    %177 = vset.pattern.permute.xlu0 0
    %178 = vperm.xlu0 %177, %v80
    %v179 = vpop.permute.xlu0 %178
    %182 = vset.pattern.permute.xlu0 0
    %183 = vperm.xlu0 %182, %v81
    %v184 = vpop.permute.xlu0 %183
    %187 = vset.pattern.permute.xlu0 0
    %188 = vperm.xlu0 %187, %v82
    %v189 = vpop.permute.xlu0 %188
    %192 = vset.pattern.permute.xlu0 0
    %193 = vperm.xlu0 %192, %v83
    %v194 = vpop.permute.xlu0 %193
    %197 = vset.pattern.permute.xlu0 0
    %198 = vperm.xlu0 %197, %v84
    %v199 = vpop.permute.xlu0 %198
    %202 = vset.pattern.permute.xlu0 0
    %203 = vperm.xlu0 %202, %v85
    %v204 = vpop.permute.xlu0 %203
    %207 = vset.pattern.permute.xlu0 0
    %208 = vperm.xlu0 %207, %v86
    %v209 = vpop.permute.xlu0 %208
    %212 = vset.pattern.permute.xlu0 0
    %213 = vperm.xlu0 %212, %v87
    %v214 = vpop.permute.xlu0 %213
    %217 = vset.pattern.permute.xlu0 0
    %218 = vperm.xlu0 %217, %v88
    %v219 = vpop.permute.xlu0 %218
    %222 = vset.pattern.permute.xlu0 0
    %223 = vperm.xlu0 %222, %v89
    %v224 = vpop.permute.xlu0 %223
    %227 = vset.pattern.permute.xlu0 0
    %228 = vperm.xlu0 %227, %v90
    %v229 = vpop.permute.xlu0 %228
    %232 = vset.pattern.permute.xlu0 0
    %233 = vperm.xlu0 %232, %v91
    %v234 = vpop.permute.xlu0 %233
    %237 = vset.pattern.permute.xlu0 0
    %238 = vperm.xlu0 %237, %v92
    %v239 = vpop.permute.xlu0 %238
    %242 = vset.pattern.permute.xlu0 0
    %243 = vperm.xlu0 %242, %v93
    %v244 = vpop.permute.xlu0 %243
    %247 = vset.pattern.permute.xlu0 0
    %248 = vperm.xlu0 %247, %v94
    %v249 = vpop.permute.xlu0 %248
    %252 = vset.pattern.permute.xlu0 0
    %253 = vperm.xlu0 %252, %v95
    %v254 = vpop.permute.xlu0 %253
    %v288 = vunpack.c.l.b16 %v32
    %v289 = vunpack.c.l.b16 %v33
    %v290 = vunpack.c.l.b16 %v34
    %v291 = vunpack.c.l.b16 %v35
    %v292 = vunpack.c.l.b16 %v36
    %v293 = vunpack.c.l.b16 %v37
    %v294 = vunpack.c.l.b16 %v38
    %v295 = vunpack.c.l.b16 %v39
    %v296 = vunpack.c.l.b16 %v40
    %v297 = vunpack.c.l.b16 %v41
    %v298 = vunpack.c.l.b16 %v42
    %v299 = vunpack.c.l.b16 %v43
    %v300 = vunpack.c.l.b16 %v44
    %v301 = vunpack.c.l.b16 %v45
    %v302 = vunpack.c.l.b16 %v46
    %v303 = vunpack.c.l.b16 %v47
    %v304 = vunpack.c.l.b16 %v48
    %v305 = vunpack.c.l.b16 %v49
    %v306 = vunpack.c.l.b16 %v50
    %v307 = vunpack.c.l.b16 %v51
    %v308 = vunpack.c.l.b16 %v52
    %v309 = vunpack.c.l.b16 %v53
    %v310 = vunpack.c.l.b16 %v54
    %v311 = vunpack.c.l.b16 %v55
    %v312 = vunpack.c.l.b16 %v56
    %v313 = vunpack.c.l.b16 %v57
    %v314 = vunpack.c.l.b16 %v58
    %v315 = vunpack.c.l.b16 %v59
    %v316 = vunpack.c.l.b16 %v60
    %v317 = vunpack.c.l.b16 %v61
    %v318 = vunpack.c.l.b16 %v62
    %v319 = vunpack.c.l.b16 %v63
    %v320 = vpack.c.b16 %v289, %v288
    %v321 = vpack.c.b16 %v291, %v290
    %v322 = vpack.c.b16 %v293, %v292
    %v323 = vpack.c.b16 %v295, %v294
    %v324 = vpack.c.b16 %v297, %v296
    %v325 = vpack.c.b16 %v299, %v298
    %v326 = vpack.c.b16 %v301, %v300
    %v327 = vpack.c.b16 %v303, %v302
    %v328 = vpack.c.b16 %v305, %v304
    %v329 = vpack.c.b16 %v307, %v306
    %v330 = vpack.c.b16 %v309, %v308
    %v331 = vpack.c.b16 %v311, %v310
    %v332 = vpack.c.b16 %v313, %v312
    %v333 = vpack.c.b16 %v315, %v314
    %v334 = vpack.c.b16 %v317, %v316
    %v335 = vpack.c.b16 %v319, %v318
    %vm336 = vcmask 48128
    %v338 = vsel %vm336, %v320, 0
    %v341 = vsel %vm336, %v321, 0
    %v344 = vsel %vm336, %v322, 0
    %v347 = vsel %vm336, %v323, 0
    %v350 = vsel %vm336, %v324, 0
    %v353 = vsel %vm336, %v325, 0
    %v356 = vsel %vm336, %v326, 0
    %v359 = vsel %vm336, %v327, 0
    %v362 = vsel %vm336, %v328, 0
    %v365 = vsel %vm336, %v329, 0
    %v368 = vsel %vm336, %v330, 0
    %v371 = vsel %vm336, %v331, 0
    %v374 = vsel %vm336, %v332, 0
    %v377 = vsel %vm336, %v333, 0
    %v380 = vsel %vm336, %v334, 0
    %v383 = vsel %vm336, %v335, 0
    %vm385 = vcmask 1042432
    %v387 = vsel %vm385, %v31, 0
    %389 = vmatprep.subr.bf16.mxu0 0
    %390 = vmatpush1.bf16.msra.mxu0 %v387
    %391 = vmatprep.subr.bf16.mxu0 0
    %392 = vmatpush1.bf16.msra.mxu0 0
    %393 = vmatprep.subr.bf16.mxu0 0
    %394 = vmatpush1.bf16.msra.mxu0 0
    %395 = vmatprep.subr.bf16.mxu0 0
    %396 = vmatpush1.bf16.msra.mxu0 0
    %397 = vmatprep.subr.bf16.mxu0 0
    %398 = vmatpush1.bf16.msra.mxu0 0
    %399 = vmatprep.subr.bf16.mxu0 0
    %400 = vmatpush1.bf16.msra.mxu0 0
    %401 = vmatprep.subr.bf16.mxu0 0
    %402 = vmatpush1.bf16.msra.mxu0 0
    %403 = vmatprep.subr.bf16.mxu0 0
    %404 = vmatpush1.bf16.msra.mxu0 0
    %405 = vmatprep.subr.bf16.mxu0 0
    %406 = vmatpush1.bf16.msra.mxu0 0
    %407 = vmatprep.subr.bf16.mxu0 0
    %408 = vmatpush1.bf16.msra.mxu0 0
    %409 = vmatprep.subr.bf16.mxu0 0
    %410 = vmatpush1.bf16.msra.mxu0 0
    %411 = vmatprep.subr.bf16.mxu0 0
    %412 = vmatpush1.bf16.msra.mxu0 0
    %413 = vmatprep.subr.bf16.mxu0 0
    %414 = vmatpush1.bf16.msra.mxu0 0
    %415 = vmatprep.subr.bf16.mxu0 0
    %416 = vmatpush1.bf16.msra.mxu0 0
    %417 = vmatprep.subr.bf16.mxu0 0
    %418 = vmatpush1.bf16.msra.mxu0 0
    %419 = vmatprep.subr.bf16.mxu0 0
    %420 = vmatpush1.bf16.msra.mxu0 0
    %421 = vmatprep.mubr.bf16.mxu0 0
    %422 = vmatmul.mubr.bf16.gmra.mrb[0].mxu0 %v338
    %v423 = vpop.f32.mrb[0].mxu0
    %v424 = vadd.f32 %v99, %v423
    %v425 = vpop.f32.mrb[0].mxu0
    %v426 = vpop.f32.mrb[0].mxu0
    %v427 = vadd.f32 %v104, %v426
    %v428 = vpop.f32.mrb[0].mxu0
    %429 = vmatprep.mubr.bf16.mxu0 0
    %430 = vmatmul.mubr.bf16.gmra.mrb[0].mxu0 %v341
    %v431 = vpop.f32.mrb[0].mxu0
    %v432 = vadd.f32 %v109, %v431
    %v433 = vpop.f32.mrb[0].mxu0
    %v434 = vpop.f32.mrb[0].mxu0
    %v435 = vadd.f32 %v114, %v434
    %v436 = vpop.f32.mrb[0].mxu0
    %437 = vmatprep.mubr.bf16.mxu0 0
    %438 = vmatmul.mubr.bf16.gmra.mrb[0].mxu0 %v344
    %v439 = vpop.f32.mrb[0].mxu0
    %v440 = vadd.f32 %v119, %v439
    %v441 = vpop.f32.mrb[0].mxu0
    %v442 = vpop.f32.mrb[0].mxu0
    %v443 = vadd.f32 %v124, %v442
    %v444 = vpop.f32.mrb[0].mxu0
    %445 = vmatprep.mubr.bf16.mxu0 0
    %446 = vmatmul.mubr.bf16.gmra.mrb[0].mxu0 %v347
    %v447 = vpop.f32.mrb[0].mxu0
    %v448 = vadd.f32 %v129, %v447
    %v449 = vpop.f32.mrb[0].mxu0
    %v450 = vpop.f32.mrb[0].mxu0
    %v451 = vadd.f32 %v134, %v450
    %v452 = vpop.f32.mrb[0].mxu0
    %453 = vmatprep.mubr.bf16.mxu0 0
    %454 = vmatmul.mubr.bf16.gmra.mrb[0].mxu0 %v350
    %v455 = vpop.f32.mrb[0].mxu0
    %v456 = vadd.f32 %v139, %v455
    %v457 = vpop.f32.mrb[0].mxu0
    %v458 = vpop.f32.mrb[0].mxu0
    %v459 = vadd.f32 %v144, %v458
    %v460 = vpop.f32.mrb[0].mxu0
    %461 = vmatprep.mubr.bf16.mxu0 0
    %462 = vmatmul.mubr.bf16.gmra.mrb[0].mxu0 %v353
    %v463 = vpop.f32.mrb[0].mxu0
    %v464 = vadd.f32 %v149, %v463
    %v465 = vpop.f32.mrb[0].mxu0
    %v466 = vpop.f32.mrb[0].mxu0
    %v467 = vadd.f32 %v154, %v466
    %v468 = vpop.f32.mrb[0].mxu0
    %469 = vmatprep.mubr.bf16.mxu0 0
    %470 = vmatmul.mubr.bf16.gmra.mrb[0].mxu0 %v356
    %v471 = vpop.f32.mrb[0].mxu0
    %v472 = vadd.f32 %v159, %v471
    %v473 = vpop.f32.mrb[0].mxu0
    %v474 = vpop.f32.mrb[0].mxu0
    %v475 = vadd.f32 %v164, %v474
    %v476 = vpop.f32.mrb[0].mxu0
    %477 = vmatprep.mubr.bf16.mxu0 0
    %478 = vmatmul.mubr.bf16.gmra.mrb[0].mxu0 %v359
    %v479 = vpop.f32.mrb[0].mxu0
    %v480 = vadd.f32 %v169, %v479
    %v481 = vpop.f32.mrb[0].mxu0
    %v482 = vpop.f32.mrb[0].mxu0
    %v483 = vadd.f32 %v174, %v482
    %v484 = vpop.f32.mrb[0].mxu0
    %485 = vmatprep.mubr.bf16.mxu0 0
    %486 = vmatmul.mubr.bf16.gmra.mrb[0].mxu0 %v362
    %v487 = vpop.f32.mrb[0].mxu0
    %v488 = vadd.f32 %v179, %v487
    %v489 = vpop.f32.mrb[0].mxu0
    %v490 = vpop.f32.mrb[0].mxu0
    %v491 = vadd.f32 %v184, %v490
    %v492 = vpop.f32.mrb[0].mxu0
    %493 = vmatprep.mubr.bf16.mxu0 0
    %494 = vmatmul.mubr.bf16.gmra.mrb[0].mxu0 %v365
    %v495 = vpop.f32.mrb[0].mxu0
    %v496 = vadd.f32 %v189, %v495
    %v497 = vpop.f32.mrb[0].mxu0
    %v498 = vpop.f32.mrb[0].mxu0
    %v499 = vadd.f32 %v194, %v498
    %v500 = vpop.f32.mrb[0].mxu0
    %501 = vmatprep.mubr.bf16.mxu0 0
    %502 = vmatmul.mubr.bf16.gmra.mrb[0].mxu0 %v368
    %v503 = vpop.f32.mrb[0].mxu0
    %v504 = vadd.f32 %v199, %v503
    %v505 = vpop.f32.mrb[0].mxu0
    %v506 = vpop.f32.mrb[0].mxu0
    %v507 = vadd.f32 %v204, %v506
    %v508 = vpop.f32.mrb[0].mxu0
    %509 = vmatprep.mubr.bf16.mxu0 0
    %510 = vmatmul.mubr.bf16.gmra.mrb[0].mxu0 %v371
    %v511 = vpop.f32.mrb[0].mxu0
    %v512 = vadd.f32 %v209, %v511
    %v513 = vpop.f32.mrb[0].mxu0
    %v514 = vpop.f32.mrb[0].mxu0
    %v515 = vadd.f32 %v214, %v514
    %v516 = vpop.f32.mrb[0].mxu0
    %517 = vmatprep.mubr.bf16.mxu0 0
    %518 = vmatmul.mubr.bf16.gmra.mrb[0].mxu0 %v374
    %v519 = vpop.f32.mrb[0].mxu0
    %v520 = vadd.f32 %v219, %v519
    %v521 = vpop.f32.mrb[0].mxu0
    %v522 = vpop.f32.mrb[0].mxu0
    %v523 = vadd.f32 %v224, %v522
    %v524 = vpop.f32.mrb[0].mxu0
    %525 = vmatprep.mubr.bf16.mxu0 0
    %526 = vmatmul.mubr.bf16.gmra.mrb[0].mxu0 %v377
    %v527 = vpop.f32.mrb[0].mxu0
    %v528 = vadd.f32 %v229, %v527
    %v529 = vpop.f32.mrb[0].mxu0
    %v530 = vpop.f32.mrb[0].mxu0
    %v531 = vadd.f32 %v234, %v530
    %v532 = vpop.f32.mrb[0].mxu0
    %533 = vmatprep.mubr.bf16.mxu0 0
    %534 = vmatmul.mubr.bf16.gmra.mrb[0].mxu0 %v380
    %v535 = vpop.f32.mrb[0].mxu0
    %v536 = vadd.f32 %v239, %v535
    %v537 = vpop.f32.mrb[0].mxu0
    %v538 = vpop.f32.mrb[0].mxu0
    %v539 = vadd.f32 %v244, %v538
    %v540 = vpop.f32.mrb[0].mxu0
    %541 = vmatprep.mubr.bf16.mxu0 0
    %542 = vmatmul.mubr.bf16.gmra.mrb[0].mxu0 %v383
    %v543 = vpop.f32.mrb[0].mxu0
    %v544 = vadd.f32 %v249, %v543
    %v545 = vpop.f32.mrb[0].mxu0
    %v546 = vpop.f32.mrb[0].mxu0
    %v547 = vadd.f32 %v254, %v546
    %v548 = vpop.f32.mrb[0].mxu0
    %549 = vdwg.mxu0
    %v550 = vmax.f32 %v424, 0.0
    %v551 = vmax.f32 %v427, 0.0
    %v552 = vmax.f32 %v432, 0.0
    %v553 = vmax.f32 %v435, 0.0
    %v554 = vmax.f32 %v440, 0.0
    %v555 = vmax.f32 %v443, 0.0
    %v556 = vmax.f32 %v448, 0.0
    %v557 = vmax.f32 %v451, 0.0
    %v558 = vmax.f32 %v456, 0.0
    %v559 = vmax.f32 %v459, 0.0
    %v560 = vmax.f32 %v464, 0.0
    %v561 = vmax.f32 %v467, 0.0
    %v562 = vmax.f32 %v472, 0.0
    %v563 = vmax.f32 %v475, 0.0
    %v564 = vmax.f32 %v480, 0.0
    %v565 = vmax.f32 %v483, 0.0
    %v566 = vmax.f32 %v488, 0.0
    %v567 = vmax.f32 %v491, 0.0
    %v568 = vmax.f32 %v496, 0.0
    %v569 = vmax.f32 %v499, 0.0
    %v570 = vmax.f32 %v504, 0.0
    %v571 = vmax.f32 %v507, 0.0
    %v572 = vmax.f32 %v512, 0.0
    %v573 = vmax.f32 %v515, 0.0
    %v574 = vmax.f32 %v520, 0.0
    %v575 = vmax.f32 %v523, 0.0
    %v576 = vmax.f32 %v528, 0.0
    %v577 = vmax.f32 %v531, 0.0
    %v578 = vmax.f32 %v536, 0.0
    %v579 = vmax.f32 %v539, 0.0
    %v580 = vmax.f32 %v544, 0.0
    %v581 = vmax.f32 %v547, 0.0
    %v582 = vpack.c.bf16 %v551, %v550
    %v583 = vpack.c.bf16 %v553, %v552
    %v584 = vpack.c.bf16 %v555, %v554
    %v585 = vpack.c.bf16 %v557, %v556
    %v586 = vpack.c.bf16 %v559, %v558
    %v587 = vpack.c.bf16 %v561, %v560
    %v588 = vpack.c.bf16 %v563, %v562
    %v589 = vpack.c.bf16 %v565, %v564
    %v590 = vpack.c.bf16 %v567, %v566
    %v591 = vpack.c.bf16 %v569, %v568
    %v592 = vpack.c.bf16 %v571, %v570
    %v593 = vpack.c.bf16 %v573, %v572
    %v594 = vpack.c.bf16 %v575, %v574
    %v595 = vpack.c.bf16 %v577, %v576
    %v596 = vpack.c.bf16 %v579, %v578
    %v597 = vpack.c.bf16 %v581, %v580
    %v598 = vld [vmem:[%s3] sm:$0xff]
    %v599 = vld [vmem:[%s3 + $0x8] sm:$0xff]
    %v600 = vld [vmem:[%s3 + $0x10] sm:$0xff]
    %v601 = vld [vmem:[%s3 + $0x18] sm:$0xff]
    %v602 = vld [vmem:[%s3 + $0x20] sm:$0xff]
    %v603 = vld [vmem:[%s3 + $0x28] sm:$0xff]
    %v604 = vld [vmem:[%s3 + $0x30] sm:$0xff]
    %v605 = vld [vmem:[%s3 + $0x38] sm:$0xff]
    %v606 = vld [vmem:[%s3 + $0x40] sm:$0xff]
    %v607 = vld [vmem:[%s3 + $0x48] sm:$0xff]
    %v608 = vld [vmem:[%s3 + $0x50] sm:$0xff]
    %v609 = vld [vmem:[%s3 + $0x58] sm:$0xff]
    %v610 = vld [vmem:[%s3 + $0x60] sm:$0xff]
    %v611 = vld [vmem:[%s3 + $0x68] sm:$0xff]
    %v612 = vld [vmem:[%s3 + $0x70] sm:$0xff]
    %v613 = vld [vmem:[%s3 + $0x78] sm:$0xff]
    %v614 = vld [vmem:[%s3 + $0x80] sm:$0xff]
    %v615 = vld [vmem:[%s3 + $0x88] sm:$0xff]
    %v616 = vld [vmem:[%s3 + $0x90] sm:$0xff]
    %v617 = vld [vmem:[%s3 + $0x98] sm:$0xff]
    %v618 = vld [vmem:[%s3 + $0xa0] sm:$0xff]
    %v619 = vld [vmem:[%s3 + $0xa8] sm:$0xff]
    %v620 = vld [vmem:[%s3 + $0xb0] sm:$0xff]
    %v621 = vld [vmem:[%s3 + $0xb8] sm:$0xff]
    %v622 = vld [vmem:[%s3 + $0xc0] sm:$0xff]
    %v623 = vld [vmem:[%s3 + $0xc8] sm:$0xff]
    %v624 = vld [vmem:[%s3 + $0xd0] sm:$0xff]
    %v625 = vld [vmem:[%s3 + $0xd8] sm:$0xff]
    %v626 = vld [vmem:[%s3 + $0xe0] sm:$0xff]
    %v627 = vld [vmem:[%s3 + $0xe8] sm:$0xff]
    %v628 = vld [vmem:[%s3 + $0xf0] sm:$0xff]
    %v629 = vld [vmem:[%s3 + $0xf8] sm:$0xff]
    %v630 = vld [vmem:[%s3 + $0x100] sm:$0xff]
    %v631 = vld [vmem:[%s3 + $0x108] sm:$0xff]
    %v632 = vld [vmem:[%s3 + $0x110] sm:$0xff]
    %v633 = vld [vmem:[%s3 + $0x118] sm:$0xff]
    %v634 = vld [vmem:[%s3 + $0x120] sm:$0xff]
    %v635 = vld [vmem:[%s3 + $0x128] sm:$0xff]
    %v636 = vld [vmem:[%s3 + $0x130] sm:$0xff]
    %v637 = vld [vmem:[%s3 + $0x138] sm:$0xff]
    %v638 = vld [vmem:[%s3 + $0x140] sm:$0xff]
    %v639 = vld [vmem:[%s3 + $0x148] sm:$0xff]
    %v640 = vld [vmem:[%s3 + $0x150] sm:$0xff]
    %v641 = vld [vmem:[%s3 + $0x158] sm:$0xff]
    %v642 = vld [vmem:[%s3 + $0x160] sm:$0xff]
    %v643 = vld [vmem:[%s3 + $0x168] sm:$0xff]
    %v644 = vld [vmem:[%s3 + $0x170] sm:$0xff]
    %v645 = vld [vmem:[%s3 + $0x178] sm:$0xff]
    %v646 = vld [vmem:[%s3 + $0x180] sm:$0xff]
    %v647 = vld [vmem:[%s3 + $0x188] sm:$0xff]
    %v648 = vld [vmem:[%s3 + $0x190] sm:$0xff]
    %v649 = vld [vmem:[%s3 + $0x198] sm:$0xff]
    %v650 = vld [vmem:[%s3 + $0x1a0] sm:$0xff]
    %v651 = vld [vmem:[%s3 + $0x1a8] sm:$0xff]
    %v652 = vld [vmem:[%s3 + $0x1b0] sm:$0xff]
    %v653 = vld [vmem:[%s3 + $0x1b8] sm:$0xff]
    %v654 = vld [vmem:[%s3 + $0x1c0] sm:$0xff]
    %v655 = vld [vmem:[%s3 + $0x1c8] sm:$0xff]
    %v656 = vld [vmem:[%s3 + $0x1d0] sm:$0xff]
    %v657 = vld [vmem:[%s3 + $0x1d8] sm:$0xff]
    %v658 = vld [vmem:[%s3 + $0x1e0] sm:$0xff]
    %v659 = vld [vmem:[%s3 + $0x1e8] sm:$0xff]
    %v660 = vld [vmem:[%s3 + $0x1f0] sm:$0xff]
    %v661 = vld [vmem:[%s3 + $0x1f8] sm:$0xff]
    %v662 = vld [vmem:[%s4] sm:$0xff]
    %v663 = vld [vmem:[%s4 + $0x8] sm:$0xff]
    %v664 = vld [vmem:[%s4 + $0x10] sm:$0xff]
    %v665 = vld [vmem:[%s4 + $0x18] sm:$0xff]
    %v666 = vld [vmem:[%s4 + $0x20] sm:$0xff]
    %v667 = vld [vmem:[%s4 + $0x28] sm:$0xff]
    %v668 = vld [vmem:[%s4 + $0x30] sm:$0xff]
    %v669 = vld [vmem:[%s4 + $0x38] sm:$0xff]
    %v670 = vld [vmem:[%s4 + $0x40] sm:$0xff]
    %v671 = vld [vmem:[%s4 + $0x48] sm:$0xff]
    %v672 = vld [vmem:[%s4 + $0x50] sm:$0xff]
    %v673 = vld [vmem:[%s4 + $0x58] sm:$0xff]
    %v674 = vld [vmem:[%s4 + $0x60] sm:$0xff]
    %v675 = vld [vmem:[%s4 + $0x68] sm:$0xff]
    %v676 = vld [vmem:[%s4 + $0x70] sm:$0xff]
    %v677 = vld [vmem:[%s4 + $0x78] sm:$0xff]
    %v678 = vld [vmem:[%s4 + $0x80] sm:$0xff]
    %v679 = vld [vmem:[%s4 + $0x88] sm:$0xff]
    %v680 = vld [vmem:[%s4 + $0x90] sm:$0xff]
    %v681 = vld [vmem:[%s4 + $0x98] sm:$0xff]
    %v682 = vld [vmem:[%s4 + $0xa0] sm:$0xff]
    %v683 = vld [vmem:[%s4 + $0xa8] sm:$0xff]
    %v684 = vld [vmem:[%s4 + $0xb0] sm:$0xff]
    %v685 = vld [vmem:[%s4 + $0xb8] sm:$0xff]
    %v686 = vld [vmem:[%s4 + $0xc0] sm:$0xff]
    %v687 = vld [vmem:[%s4 + $0xc8] sm:$0xff]
    %v688 = vld [vmem:[%s4 + $0xd0] sm:$0xff]
    %v689 = vld [vmem:[%s4 + $0xd8] sm:$0xff]
    %v690 = vld [vmem:[%s4 + $0xe0] sm:$0xff]
    %v691 = vld [vmem:[%s4 + $0xe8] sm:$0xff]
    %v692 = vld [vmem:[%s4 + $0xf0] sm:$0xff]
    %v693 = vld [vmem:[%s4 + $0xf8] sm:$0xff]
    %v694 = vld [vmem:[%s4 + $0x100] sm:$0xff]
    %v695 = vld [vmem:[%s4 + $0x108] sm:$0xff]
    %v696 = vld [vmem:[%s4 + $0x110] sm:$0xff]
    %v697 = vld [vmem:[%s4 + $0x118] sm:$0xff]
    %v698 = vld [vmem:[%s4 + $0x120] sm:$0xff]
    %v699 = vld [vmem:[%s4 + $0x128] sm:$0xff]
    %v700 = vld [vmem:[%s4 + $0x130] sm:$0xff]
    %v701 = vld [vmem:[%s4 + $0x138] sm:$0xff]
    %v702 = vld [vmem:[%s4 + $0x140] sm:$0xff]
    %v703 = vld [vmem:[%s4 + $0x148] sm:$0xff]
    %v704 = vld [vmem:[%s4 + $0x150] sm:$0xff]
    %v705 = vld [vmem:[%s4 + $0x158] sm:$0xff]
    %v706 = vld [vmem:[%s4 + $0x160] sm:$0xff]
    %v707 = vld [vmem:[%s4 + $0x168] sm:$0xff]
    %v708 = vld [vmem:[%s4 + $0x170] sm:$0xff]
    %v709 = vld [vmem:[%s4 + $0x178] sm:$0xff]
    %v710 = vld [vmem:[%s4 + $0x180] sm:$0xff]
    %v711 = vld [vmem:[%s4 + $0x188] sm:$0xff]
    %v712 = vld [vmem:[%s4 + $0x190] sm:$0xff]
    %v713 = vld [vmem:[%s4 + $0x198] sm:$0xff]
    %v714 = vld [vmem:[%s4 + $0x1a0] sm:$0xff]
    %v715 = vld [vmem:[%s4 + $0x1a8] sm:$0xff]
    %v716 = vld [vmem:[%s4 + $0x1b0] sm:$0xff]
    %v717 = vld [vmem:[%s4 + $0x1b8] sm:$0xff]
    %v718 = vld [vmem:[%s4 + $0x1c0] sm:$0xff]
    %v719 = vld [vmem:[%s4 + $0x1c8] sm:$0xff]
    %v720 = vld [vmem:[%s4 + $0x1d0] sm:$0xff]
    %v721 = vld [vmem:[%s4 + $0x1d8] sm:$0xff]
    %v722 = vld [vmem:[%s4 + $0x1e0] sm:$0xff]
    %v723 = vld [vmem:[%s4 + $0x1e8] sm:$0xff]
    %v724 = vld [vmem:[%s4 + $0x1f0] sm:$0xff]
    %v725 = vld [vmem:[%s4 + $0x1f8] sm:$0xff]
    %727 = vset.pattern.permute.xlu0 0
    %728 = vperm.xlu0 %727, %v662
    %v729 = vpop.permute.xlu0 %728
    %732 = vset.pattern.permute.xlu0 0
    %733 = vperm.xlu0 %732, %v663
    %v734 = vpop.permute.xlu0 %733
    %737 = vset.pattern.permute.xlu0 0
    %738 = vperm.xlu0 %737, %v664
    %v739 = vpop.permute.xlu0 %738
    %742 = vset.pattern.permute.xlu0 0
    %743 = vperm.xlu0 %742, %v665
    %v744 = vpop.permute.xlu0 %743
    %747 = vset.pattern.permute.xlu0 0
    %748 = vperm.xlu0 %747, %v666
    %v749 = vpop.permute.xlu0 %748
    %752 = vset.pattern.permute.xlu0 0
    %753 = vperm.xlu0 %752, %v667
    %v754 = vpop.permute.xlu0 %753
    %757 = vset.pattern.permute.xlu0 0
    %758 = vperm.xlu0 %757, %v668
    %v759 = vpop.permute.xlu0 %758
    %762 = vset.pattern.permute.xlu0 0
    %763 = vperm.xlu0 %762, %v669
    %v764 = vpop.permute.xlu0 %763
    %767 = vset.pattern.permute.xlu0 0
    %768 = vperm.xlu0 %767, %v670
    %v769 = vpop.permute.xlu0 %768
    %772 = vset.pattern.permute.xlu0 0
    %773 = vperm.xlu0 %772, %v671
    %v774 = vpop.permute.xlu0 %773
    %777 = vset.pattern.permute.xlu0 0
    %778 = vperm.xlu0 %777, %v672
    %v779 = vpop.permute.xlu0 %778
    %782 = vset.pattern.permute.xlu0 0
    %783 = vperm.xlu0 %782, %v673
    %v784 = vpop.permute.xlu0 %783
    %787 = vset.pattern.permute.xlu0 0
    %788 = vperm.xlu0 %787, %v674
    %v789 = vpop.permute.xlu0 %788
    %792 = vset.pattern.permute.xlu0 0
    %793 = vperm.xlu0 %792, %v675
    %v794 = vpop.permute.xlu0 %793
    %797 = vset.pattern.permute.xlu0 0
    %798 = vperm.xlu0 %797, %v676
    %v799 = vpop.permute.xlu0 %798
    %802 = vset.pattern.permute.xlu0 0
    %803 = vperm.xlu0 %802, %v677
    %v804 = vpop.permute.xlu0 %803
    %807 = vset.pattern.permute.xlu0 0
    %808 = vperm.xlu0 %807, %v678
    %v809 = vpop.permute.xlu0 %808
    %812 = vset.pattern.permute.xlu0 0
    %813 = vperm.xlu0 %812, %v679
    %v814 = vpop.permute.xlu0 %813
    %817 = vset.pattern.permute.xlu0 0
    %818 = vperm.xlu0 %817, %v680
    %v819 = vpop.permute.xlu0 %818
    %822 = vset.pattern.permute.xlu0 0
    %823 = vperm.xlu0 %822, %v681
    %v824 = vpop.permute.xlu0 %823
    %827 = vset.pattern.permute.xlu0 0
    %828 = vperm.xlu0 %827, %v682
    %v829 = vpop.permute.xlu0 %828
    %832 = vset.pattern.permute.xlu0 0
    %833 = vperm.xlu0 %832, %v683
    %v834 = vpop.permute.xlu0 %833
    %837 = vset.pattern.permute.xlu0 0
    %838 = vperm.xlu0 %837, %v684
    %v839 = vpop.permute.xlu0 %838
    %842 = vset.pattern.permute.xlu0 0
    %843 = vperm.xlu0 %842, %v685
    %v844 = vpop.permute.xlu0 %843
    %847 = vset.pattern.permute.xlu0 0
    %848 = vperm.xlu0 %847, %v686
    %v849 = vpop.permute.xlu0 %848
    %852 = vset.pattern.permute.xlu0 0
    %853 = vperm.xlu0 %852, %v687
    %v854 = vpop.permute.xlu0 %853
    %857 = vset.pattern.permute.xlu0 0
    %858 = vperm.xlu0 %857, %v688
    %v859 = vpop.permute.xlu0 %858
    %862 = vset.pattern.permute.xlu0 0
    %863 = vperm.xlu0 %862, %v689
    %v864 = vpop.permute.xlu0 %863
    %867 = vset.pattern.permute.xlu0 0
    %868 = vperm.xlu0 %867, %v690
    %v869 = vpop.permute.xlu0 %868
    %872 = vset.pattern.permute.xlu0 0
    %873 = vperm.xlu0 %872, %v691
    %v874 = vpop.permute.xlu0 %873
    %877 = vset.pattern.permute.xlu0 0
    %878 = vperm.xlu0 %877, %v692
    %v879 = vpop.permute.xlu0 %878
    %882 = vset.pattern.permute.xlu0 0
    %883 = vperm.xlu0 %882, %v693
    %v884 = vpop.permute.xlu0 %883
    %887 = vset.pattern.permute.xlu0 0
    %888 = vperm.xlu0 %887, %v694
    %v889 = vpop.permute.xlu0 %888
    %892 = vset.pattern.permute.xlu0 0
    %893 = vperm.xlu0 %892, %v695
    %v894 = vpop.permute.xlu0 %893
    %897 = vset.pattern.permute.xlu0 0
    %898 = vperm.xlu0 %897, %v696
    %v899 = vpop.permute.xlu0 %898
    %902 = vset.pattern.permute.xlu0 0
    %903 = vperm.xlu0 %902, %v697
    %v904 = vpop.permute.xlu0 %903
    %907 = vset.pattern.permute.xlu0 0
    %908 = vperm.xlu0 %907, %v698
    %v909 = vpop.permute.xlu0 %908
    %912 = vset.pattern.permute.xlu0 0
    %913 = vperm.xlu0 %912, %v699
    %v914 = vpop.permute.xlu0 %913
    %917 = vset.pattern.permute.xlu0 0
    %918 = vperm.xlu0 %917, %v700
    %v919 = vpop.permute.xlu0 %918
    %922 = vset.pattern.permute.xlu0 0
    %923 = vperm.xlu0 %922, %v701
    %v924 = vpop.permute.xlu0 %923
    %927 = vset.pattern.permute.xlu0 0
    %928 = vperm.xlu0 %927, %v702
    %v929 = vpop.permute.xlu0 %928
    %932 = vset.pattern.permute.xlu0 0
    %933 = vperm.xlu0 %932, %v703
    %v934 = vpop.permute.xlu0 %933
    %937 = vset.pattern.permute.xlu0 0
    %938 = vperm.xlu0 %937, %v704
    %v939 = vpop.permute.xlu0 %938
    %942 = vset.pattern.permute.xlu0 0
    %943 = vperm.xlu0 %942, %v705
    %v944 = vpop.permute.xlu0 %943
    %947 = vset.pattern.permute.xlu0 0
    %948 = vperm.xlu0 %947, %v706
    %v949 = vpop.permute.xlu0 %948
    %952 = vset.pattern.permute.xlu0 0
    %953 = vperm.xlu0 %952, %v707
    %v954 = vpop.permute.xlu0 %953
    %957 = vset.pattern.permute.xlu0 0
    %958 = vperm.xlu0 %957, %v708
    %v959 = vpop.permute.xlu0 %958
    %962 = vset.pattern.permute.xlu0 0
    %963 = vperm.xlu0 %962, %v709
    %v964 = vpop.permute.xlu0 %963
    %967 = vset.pattern.permute.xlu0 0
    %968 = vperm.xlu0 %967, %v710
    %v969 = vpop.permute.xlu0 %968
    %972 = vset.pattern.permute.xlu0 0
    %973 = vperm.xlu0 %972, %v711
    %v974 = vpop.permute.xlu0 %973
    %977 = vset.pattern.permute.xlu0 0
    %978 = vperm.xlu0 %977, %v712
    %v979 = vpop.permute.xlu0 %978
    %982 = vset.pattern.permute.xlu0 0
    %983 = vperm.xlu0 %982, %v713
    %v984 = vpop.permute.xlu0 %983
    %987 = vset.pattern.permute.xlu0 0
    %988 = vperm.xlu0 %987, %v714
    %v989 = vpop.permute.xlu0 %988
    %992 = vset.pattern.permute.xlu0 0
    %993 = vperm.xlu0 %992, %v715
    %v994 = vpop.permute.xlu0 %993
    %997 = vset.pattern.permute.xlu0 0
    %998 = vperm.xlu0 %997, %v716
    %v999 = vpop.permute.xlu0 %998
    %1002 = vset.pattern.permute.xlu0 0
    %1003 = vperm.xlu0 %1002, %v717
    %v1004 = vpop.permute.xlu0 %1003
    %1007 = vset.pattern.permute.xlu0 0
    %1008 = vperm.xlu0 %1007, %v718
    %v1009 = vpop.permute.xlu0 %1008
    %1012 = vset.pattern.permute.xlu0 0
    %1013 = vperm.xlu0 %1012, %v719
    %v1014 = vpop.permute.xlu0 %1013
    %1017 = vset.pattern.permute.xlu0 0
    %1018 = vperm.xlu0 %1017, %v720
    %v1019 = vpop.permute.xlu0 %1018
    %1022 = vset.pattern.permute.xlu0 0
    %1023 = vperm.xlu0 %1022, %v721
    %v1024 = vpop.permute.xlu0 %1023
    %1027 = vset.pattern.permute.xlu0 0
    %1028 = vperm.xlu0 %1027, %v722
    %v1029 = vpop.permute.xlu0 %1028
    %1032 = vset.pattern.permute.xlu0 0
    %1033 = vperm.xlu0 %1032, %v723
    %v1034 = vpop.permute.xlu0 %1033
    %1037 = vset.pattern.permute.xlu0 0
    %1038 = vperm.xlu0 %1037, %v724
    %v1039 = vpop.permute.xlu0 %1038
    %1042 = vset.pattern.permute.xlu0 0
    %1043 = vperm.xlu0 %1042, %v725
    %v1044 = vpop.permute.xlu0 %1043
    %v1110 = vunpack.c.l.b16 %v598
    %v1111 = vunpack.c.h.b16 %v598
    %v1112 = vunpack.c.l.b16 %v599
    %v1113 = vunpack.c.h.b16 %v599
    %v1114 = vunpack.c.l.b16 %v600
    %v1115 = vunpack.c.h.b16 %v600
    %v1116 = vunpack.c.l.b16 %v601
    %v1117 = vunpack.c.h.b16 %v601
    %v1118 = vunpack.c.l.b16 %v602
    %v1119 = vunpack.c.h.b16 %v602
    %v1120 = vunpack.c.l.b16 %v603
    %v1121 = vunpack.c.h.b16 %v603
    %v1122 = vunpack.c.l.b16 %v604
    %v1123 = vunpack.c.h.b16 %v604
    %v1124 = vunpack.c.l.b16 %v605
    %v1125 = vunpack.c.h.b16 %v605
    %v1126 = vunpack.c.l.b16 %v606
    %v1127 = vunpack.c.h.b16 %v606
    %v1128 = vunpack.c.l.b16 %v607
    %v1129 = vunpack.c.h.b16 %v607
    %v1130 = vunpack.c.l.b16 %v608
    %v1131 = vunpack.c.h.b16 %v608
    %v1132 = vunpack.c.l.b16 %v609
    %v1133 = vunpack.c.h.b16 %v609
    %v1134 = vunpack.c.l.b16 %v610
    %v1135 = vunpack.c.h.b16 %v610
    %v1136 = vunpack.c.l.b16 %v611
    %v1137 = vunpack.c.h.b16 %v611
    %v1138 = vunpack.c.l.b16 %v612
    %v1139 = vunpack.c.h.b16 %v612
    %v1140 = vunpack.c.l.b16 %v613
    %v1141 = vunpack.c.h.b16 %v613
    %v1142 = vunpack.c.l.b16 %v614
    %v1143 = vunpack.c.h.b16 %v614
    %v1144 = vunpack.c.l.b16 %v615
    %v1145 = vunpack.c.h.b16 %v615
    %v1146 = vunpack.c.l.b16 %v616
    %v1147 = vunpack.c.h.b16 %v616
    %v1148 = vunpack.c.l.b16 %v617
    %v1149 = vunpack.c.h.b16 %v617
    %v1150 = vunpack.c.l.b16 %v618
    %v1151 = vunpack.c.h.b16 %v618
    %v1152 = vunpack.c.l.b16 %v619
    %v1153 = vunpack.c.h.b16 %v619
    %v1154 = vunpack.c.l.b16 %v620
    %v1155 = vunpack.c.h.b16 %v620
    %v1156 = vunpack.c.l.b16 %v621
    %v1157 = vunpack.c.h.b16 %v621
    %v1158 = vunpack.c.l.b16 %v622
    %v1159 = vunpack.c.h.b16 %v622
    %v1160 = vunpack.c.l.b16 %v623
    %v1161 = vunpack.c.h.b16 %v623
    %v1162 = vunpack.c.l.b16 %v624
    %v1163 = vunpack.c.h.b16 %v624
    %v1164 = vunpack.c.l.b16 %v625
    %v1165 = vunpack.c.h.b16 %v625
    %v1166 = vunpack.c.l.b16 %v626
    %v1167 = vunpack.c.h.b16 %v626
    %v1168 = vunpack.c.l.b16 %v627
    %v1169 = vunpack.c.h.b16 %v627
    %v1170 = vunpack.c.l.b16 %v628
    %v1171 = vunpack.c.h.b16 %v628
    %v1172 = vunpack.c.l.b16 %v629
    %v1173 = vunpack.c.h.b16 %v629
    %v1174 = vunpack.c.l.b16 %v630
    %v1175 = vunpack.c.h.b16 %v630
    %v1176 = vunpack.c.l.b16 %v631
    %v1177 = vunpack.c.h.b16 %v631
    %v1178 = vunpack.c.l.b16 %v632
    %v1179 = vunpack.c.h.b16 %v632
    %v1180 = vunpack.c.l.b16 %v633
    %v1181 = vunpack.c.h.b16 %v633
    %v1182 = vunpack.c.l.b16 %v634
    %v1183 = vunpack.c.h.b16 %v634
    %v1184 = vunpack.c.l.b16 %v635
    %v1185 = vunpack.c.h.b16 %v635
    %v1186 = vunpack.c.l.b16 %v636
    %v1187 = vunpack.c.h.b16 %v636
    %v1188 = vunpack.c.l.b16 %v637
    %v1189 = vunpack.c.h.b16 %v637
    %v1190 = vunpack.c.l.b16 %v638
    %v1191 = vunpack.c.h.b16 %v638
    %v1192 = vunpack.c.l.b16 %v639
    %v1193 = vunpack.c.h.b16 %v639
    %v1194 = vunpack.c.l.b16 %v640
    %v1195 = vunpack.c.h.b16 %v640
    %v1196 = vunpack.c.l.b16 %v641
    %v1197 = vunpack.c.h.b16 %v641
    %v1198 = vunpack.c.l.b16 %v642
    %v1199 = vunpack.c.h.b16 %v642
    %v1200 = vunpack.c.l.b16 %v643
    %v1201 = vunpack.c.h.b16 %v643
    %v1202 = vunpack.c.l.b16 %v644
    %v1203 = vunpack.c.h.b16 %v644
    %v1204 = vunpack.c.l.b16 %v645
    %v1205 = vunpack.c.h.b16 %v645
    %v1206 = vunpack.c.l.b16 %v646
    %v1207 = vunpack.c.h.b16 %v646
    %v1208 = vunpack.c.l.b16 %v647
    %v1209 = vunpack.c.h.b16 %v647
    %v1210 = vunpack.c.l.b16 %v648
    %v1211 = vunpack.c.h.b16 %v648
    %v1212 = vunpack.c.l.b16 %v649
    %v1213 = vunpack.c.h.b16 %v649
    %v1214 = vunpack.c.l.b16 %v650
    %v1215 = vunpack.c.h.b16 %v650
    %v1216 = vunpack.c.l.b16 %v651
    %v1217 = vunpack.c.h.b16 %v651
    %v1218 = vunpack.c.l.b16 %v652
    %v1219 = vunpack.c.h.b16 %v652
    %v1220 = vunpack.c.l.b16 %v653
    %v1221 = vunpack.c.h.b16 %v653
    %v1222 = vunpack.c.l.b16 %v654
    %v1223 = vunpack.c.h.b16 %v654
    %v1224 = vunpack.c.l.b16 %v655
    %v1225 = vunpack.c.h.b16 %v655
    %v1226 = vunpack.c.l.b16 %v656
    %v1227 = vunpack.c.h.b16 %v656
    %v1228 = vunpack.c.l.b16 %v657
    %v1229 = vunpack.c.h.b16 %v657
    %v1230 = vunpack.c.l.b16 %v658
    %v1231 = vunpack.c.h.b16 %v658
    %v1232 = vunpack.c.l.b16 %v659
    %v1233 = vunpack.c.h.b16 %v659
    %v1234 = vunpack.c.l.b16 %v660
    %v1235 = vunpack.c.h.b16 %v660
    %v1236 = vunpack.c.l.b16 %v661
    %v1237 = vunpack.c.h.b16 %v661
    %v1238 = vpack.c.b16 %v1112, %v1110
    %v1239 = vpack.c.b16 %v1113, %v1111
    %v1240 = vpack.c.b16 %v1116, %v1114
    %v1241 = vpack.c.b16 %v1117, %v1115
    %v1242 = vpack.c.b16 %v1120, %v1118
    %v1243 = vpack.c.b16 %v1121, %v1119
    %v1244 = vpack.c.b16 %v1124, %v1122
    %v1245 = vpack.c.b16 %v1125, %v1123
    %v1246 = vpack.c.b16 %v1128, %v1126
    %v1247 = vpack.c.b16 %v1129, %v1127
    %v1248 = vpack.c.b16 %v1132, %v1130
    %v1249 = vpack.c.b16 %v1133, %v1131
    %v1250 = vpack.c.b16 %v1136, %v1134
    %v1251 = vpack.c.b16 %v1137, %v1135
    %v1252 = vpack.c.b16 %v1140, %v1138
    %v1253 = vpack.c.b16 %v1141, %v1139
    %v1254 = vpack.c.b16 %v1144, %v1142
    %v1255 = vpack.c.b16 %v1145, %v1143
    %v1256 = vpack.c.b16 %v1148, %v1146
    %v1257 = vpack.c.b16 %v1149, %v1147
    %v1258 = vpack.c.b16 %v1152, %v1150
    %v1259 = vpack.c.b16 %v1153, %v1151
    %v1260 = vpack.c.b16 %v1156, %v1154
    %v1261 = vpack.c.b16 %v1157, %v1155
    %v1262 = vpack.c.b16 %v1160, %v1158
    %v1263 = vpack.c.b16 %v1161, %v1159
    %v1264 = vpack.c.b16 %v1164, %v1162
    %v1265 = vpack.c.b16 %v1165, %v1163
    %v1266 = vpack.c.b16 %v1168, %v1166
    %v1267 = vpack.c.b16 %v1169, %v1167
    %v1268 = vpack.c.b16 %v1172, %v1170
    %v1269 = vpack.c.b16 %v1173, %v1171
    %v1270 = vpack.c.b16 %v1176, %v1174
    %v1271 = vpack.c.b16 %v1177, %v1175
    %v1272 = vpack.c.b16 %v1180, %v1178
    %v1273 = vpack.c.b16 %v1181, %v1179
    %v1274 = vpack.c.b16 %v1184, %v1182
    %v1275 = vpack.c.b16 %v1185, %v1183
    %v1276 = vpack.c.b16 %v1188, %v1186
    %v1277 = vpack.c.b16 %v1189, %v1187
    %v1278 = vpack.c.b16 %v1192, %v1190
    %v1279 = vpack.c.b16 %v1193, %v1191
    %v1280 = vpack.c.b16 %v1196, %v1194
    %v1281 = vpack.c.b16 %v1197, %v1195
    %v1282 = vpack.c.b16 %v1200, %v1198
    %v1283 = vpack.c.b16 %v1201, %v1199
    %v1284 = vpack.c.b16 %v1204, %v1202
    %v1285 = vpack.c.b16 %v1205, %v1203
    %v1286 = vpack.c.b16 %v1208, %v1206
    %v1287 = vpack.c.b16 %v1209, %v1207
    %v1288 = vpack.c.b16 %v1212, %v1210
    %v1289 = vpack.c.b16 %v1213, %v1211
    %v1290 = vpack.c.b16 %v1216, %v1214
    %v1291 = vpack.c.b16 %v1217, %v1215
    %v1292 = vpack.c.b16 %v1220, %v1218
    %v1293 = vpack.c.b16 %v1221, %v1219
    %v1294 = vpack.c.b16 %v1224, %v1222
    %v1295 = vpack.c.b16 %v1225, %v1223
    %v1296 = vpack.c.b16 %v1228, %v1226
    %v1297 = vpack.c.b16 %v1229, %v1227
    %v1298 = vpack.c.b16 %v1232, %v1230
    %v1299 = vpack.c.b16 %v1233, %v1231
    %v1300 = vpack.c.b16 %v1236, %v1234
    %v1301 = vpack.c.b16 %v1237, %v1235
    %1366 = vmatprep.subr.bf16.mxu0 0
    %1367 = vmatpush1.bf16.msra.mxu0 %v582
    %1368 = vmatprep.subr.bf16.mxu0 0
    %1369 = vmatpush1.bf16.msra.mxu0 %v583
    %1370 = vmatprep.subr.bf16.mxu0 0
    %1371 = vmatpush1.bf16.msra.mxu0 %v584
    %1372 = vmatprep.subr.bf16.mxu0 0
    %1373 = vmatpush1.bf16.msra.mxu0 %v585
    %1374 = vmatprep.subr.bf16.mxu0 0
    %1375 = vmatpush1.bf16.msra.mxu0 %v586
    %1376 = vmatprep.subr.bf16.mxu0 0
    %1377 = vmatpush1.bf16.msra.mxu0 %v587
    %1378 = vmatprep.subr.bf16.mxu0 0
    %1379 = vmatpush1.bf16.msra.mxu0 %v588
    %1380 = vmatprep.subr.bf16.mxu0 0
    %1381 = vmatpush1.bf16.msra.mxu0 %v589
    %1382 = vmatprep.subr.bf16.mxu0 0
    %1383 = vmatpush1.bf16.msra.mxu0 %v590
    %1384 = vmatprep.subr.bf16.mxu0 0
    %1385 = vmatpush1.bf16.msra.mxu0 %v591
    %1386 = vmatprep.subr.bf16.mxu0 0
    %1387 = vmatpush1.bf16.msra.mxu0 %v592
    %1388 = vmatprep.subr.bf16.mxu0 0
    %1389 = vmatpush1.bf16.msra.mxu0 %v593
    %1390 = vmatprep.subr.bf16.mxu0 0
    %1391 = vmatpush1.bf16.msra.mxu0 %v594
    %1392 = vmatprep.subr.bf16.mxu0 0
    %1393 = vmatpush1.bf16.msra.mxu0 %v595
    %1394 = vmatprep.subr.bf16.mxu0 0
    %1395 = vmatpush1.bf16.msra.mxu0 %v596
    %1396 = vmatprep.subr.bf16.mxu0 0
    %1397 = vmatpush1.bf16.msra.mxu0 %v597
    %1398 = vmatprep.mubr.bf16.mxu0 %v1239
    %1399 = vmatmul.mubr.bf16.gmra.mrb[0].mxu0 %v1238
    %v1400 = vpop.f32.mrb[0].mxu0
    %v1401 = vadd.f32 %v729, %v1400
    %v1402 = vpop.f32.mrb[0].mxu0
    %v1403 = vpop.f32.mrb[0].mxu0
    %v1404 = vadd.f32 %v734, %v1403
    %v1405 = vpop.f32.mrb[0].mxu0
    %1406 = vmatprep.mubr.bf16.mxu0 %v1241
    %1407 = vmatmul.mubr.bf16.gmra.mrb[0].mxu0 %v1240
    %v1408 = vpop.f32.mrb[0].mxu0
    %v1409 = vadd.f32 %v739, %v1408
    %v1410 = vpop.f32.mrb[0].mxu0
    %v1411 = vpop.f32.mrb[0].mxu0
    %v1412 = vadd.f32 %v744, %v1411
    %v1413 = vpop.f32.mrb[0].mxu0
    %1414 = vmatprep.mubr.bf16.mxu0 %v1243
    %1415 = vmatmul.mubr.bf16.gmra.mrb[0].mxu0 %v1242
    %v1416 = vpop.f32.mrb[0].mxu0
    %v1417 = vadd.f32 %v749, %v1416
    %v1418 = vpop.f32.mrb[0].mxu0
    %v1419 = vpop.f32.mrb[0].mxu0
    %v1420 = vadd.f32 %v754, %v1419
    %v1421 = vpop.f32.mrb[0].mxu0
    %1422 = vmatprep.mubr.bf16.mxu0 %v1245
    %1423 = vmatmul.mubr.bf16.gmra.mrb[0].mxu0 %v1244
    %v1424 = vpop.f32.mrb[0].mxu0
    %v1425 = vadd.f32 %v759, %v1424
    %v1426 = vpop.f32.mrb[0].mxu0
    %v1427 = vpop.f32.mrb[0].mxu0
    %v1428 = vadd.f32 %v764, %v1427
    %v1429 = vpop.f32.mrb[0].mxu0
    %1430 = vmatprep.mubr.bf16.mxu0 %v1247
    %1431 = vmatmul.mubr.bf16.gmra.mrb[0].mxu0 %v1246
    %v1432 = vpop.f32.mrb[0].mxu0
    %v1433 = vadd.f32 %v769, %v1432
    %v1434 = vpop.f32.mrb[0].mxu0
    %v1435 = vpop.f32.mrb[0].mxu0
    %v1436 = vadd.f32 %v774, %v1435
    %v1437 = vpop.f32.mrb[0].mxu0
    %1438 = vmatprep.mubr.bf16.mxu0 %v1249
    %1439 = vmatmul.mubr.bf16.gmra.mrb[0].mxu0 %v1248
    %v1440 = vpop.f32.mrb[0].mxu0
    %v1441 = vadd.f32 %v779, %v1440
    %v1442 = vpop.f32.mrb[0].mxu0
    %v1443 = vpop.f32.mrb[0].mxu0
    %v1444 = vadd.f32 %v784, %v1443
    %v1445 = vpop.f32.mrb[0].mxu0
    %1446 = vmatprep.mubr.bf16.mxu0 %v1251
    %1447 = vmatmul.mubr.bf16.gmra.mrb[0].mxu0 %v1250
    %v1448 = vpop.f32.mrb[0].mxu0
    %v1449 = vadd.f32 %v789, %v1448
    %v1450 = vpop.f32.mrb[0].mxu0
    %v1451 = vpop.f32.mrb[0].mxu0
    %v1452 = vadd.f32 %v794, %v1451
    %v1453 = vpop.f32.mrb[0].mxu0
    %1454 = vmatprep.mubr.bf16.mxu0 %v1253
    %1455 = vmatmul.mubr.bf16.gmra.mrb[0].mxu0 %v1252
    %v1456 = vpop.f32.mrb[0].mxu0
    %v1457 = vadd.f32 %v799, %v1456
    %v1458 = vpop.f32.mrb[0].mxu0
    %v1459 = vpop.f32.mrb[0].mxu0
    %v1460 = vadd.f32 %v804, %v1459
    %v1461 = vpop.f32.mrb[0].mxu0
    %1462 = vmatprep.mubr.bf16.mxu0 %v1255
    %1463 = vmatmul.mubr.bf16.gmra.mrb[0].mxu0 %v1254
    %v1464 = vpop.f32.mrb[0].mxu0
    %v1465 = vadd.f32 %v809, %v1464
    %v1466 = vpop.f32.mrb[0].mxu0
    %v1467 = vpop.f32.mrb[0].mxu0
    %v1468 = vadd.f32 %v814, %v1467
    %v1469 = vpop.f32.mrb[0].mxu0
    %1470 = vmatprep.mubr.bf16.mxu0 %v1257
    %1471 = vmatmul.mubr.bf16.gmra.mrb[0].mxu0 %v1256
    %v1472 = vpop.f32.mrb[0].mxu0
    %v1473 = vadd.f32 %v819, %v1472
    %v1474 = vpop.f32.mrb[0].mxu0
    %v1475 = vpop.f32.mrb[0].mxu0
    %v1476 = vadd.f32 %v824, %v1475
    %v1477 = vpop.f32.mrb[0].mxu0
    %1478 = vmatprep.mubr.bf16.mxu0 %v1259
    %1479 = vmatmul.mubr.bf16.gmra.mrb[0].mxu0 %v1258
    %v1480 = vpop.f32.mrb[0].mxu0
    %v1481 = vadd.f32 %v829, %v1480
    %v1482 = vpop.f32.mrb[0].mxu0
    %v1483 = vpop.f32.mrb[0].mxu0
    %v1484 = vadd.f32 %v834, %v1483
    %v1485 = vpop.f32.mrb[0].mxu0
    %1486 = vmatprep.mubr.bf16.mxu0 %v1261
    %1487 = vmatmul.mubr.bf16.gmra.mrb[0].mxu0 %v1260
    %v1488 = vpop.f32.mrb[0].mxu0
    %v1489 = vadd.f32 %v839, %v1488
    %v1490 = vpop.f32.mrb[0].mxu0
    %v1491 = vpop.f32.mrb[0].mxu0
    %v1492 = vadd.f32 %v844, %v1491
    %v1493 = vpop.f32.mrb[0].mxu0
    %1494 = vmatprep.mubr.bf16.mxu0 %v1263
    %1495 = vmatmul.mubr.bf16.gmra.mrb[0].mxu0 %v1262
    %v1496 = vpop.f32.mrb[0].mxu0
    %v1497 = vadd.f32 %v849, %v1496
    %v1498 = vpop.f32.mrb[0].mxu0
    %v1499 = vpop.f32.mrb[0].mxu0
    %v1500 = vadd.f32 %v854, %v1499
    %v1501 = vpop.f32.mrb[0].mxu0
    %1502 = vmatprep.mubr.bf16.mxu0 %v1265
    %1503 = vmatmul.mubr.bf16.gmra.mrb[0].mxu0 %v1264
    %v1504 = vpop.f32.mrb[0].mxu0
    %v1505 = vadd.f32 %v859, %v1504
    %v1506 = vpop.f32.mrb[0].mxu0
    %v1507 = vpop.f32.mrb[0].mxu0
    %v1508 = vadd.f32 %v864, %v1507
    %v1509 = vpop.f32.mrb[0].mxu0
    %1510 = vmatprep.mubr.bf16.mxu0 %v1267
    %1511 = vmatmul.mubr.bf16.gmra.mrb[0].mxu0 %v1266
    %v1512 = vpop.f32.mrb[0].mxu0
    %v1513 = vadd.f32 %v869, %v1512
    %v1514 = vpop.f32.mrb[0].mxu0
    %v1515 = vpop.f32.mrb[0].mxu0
    %v1516 = vadd.f32 %v874, %v1515
    %v1517 = vpop.f32.mrb[0].mxu0
    %1518 = vmatprep.mubr.bf16.mxu0 %v1269
    %1519 = vmatmul.mubr.bf16.gmra.mrb[0].mxu0 %v1268
    %v1520 = vpop.f32.mrb[0].mxu0
    %v1521 = vadd.f32 %v879, %v1520
    %v1522 = vpop.f32.mrb[0].mxu0
    %v1523 = vpop.f32.mrb[0].mxu0
    %v1524 = vadd.f32 %v884, %v1523
    %v1525 = vpop.f32.mrb[0].mxu0
    %1526 = vmatprep.mubr.bf16.mxu0 %v1271
    %1527 = vmatmul.mubr.bf16.gmra.mrb[0].mxu0 %v1270
    %v1528 = vpop.f32.mrb[0].mxu0
    %v1529 = vadd.f32 %v889, %v1528
    %v1530 = vpop.f32.mrb[0].mxu0
    %v1531 = vpop.f32.mrb[0].mxu0
    %v1532 = vadd.f32 %v894, %v1531
    %v1533 = vpop.f32.mrb[0].mxu0
    %1534 = vmatprep.mubr.bf16.mxu0 %v1273
    %1535 = vmatmul.mubr.bf16.gmra.mrb[0].mxu0 %v1272
    %v1536 = vpop.f32.mrb[0].mxu0
    %v1537 = vadd.f32 %v899, %v1536
    %v1538 = vpop.f32.mrb[0].mxu0
    %v1539 = vpop.f32.mrb[0].mxu0
    %v1540 = vadd.f32 %v904, %v1539
    %v1541 = vpop.f32.mrb[0].mxu0
    %1542 = vmatprep.mubr.bf16.mxu0 %v1275
    %1543 = vmatmul.mubr.bf16.gmra.mrb[0].mxu0 %v1274
    %v1544 = vpop.f32.mrb[0].mxu0
    %v1545 = vadd.f32 %v909, %v1544
    %v1546 = vpop.f32.mrb[0].mxu0
    %v1547 = vpop.f32.mrb[0].mxu0
    %v1548 = vadd.f32 %v914, %v1547
    %v1549 = vpop.f32.mrb[0].mxu0
    %1550 = vmatprep.mubr.bf16.mxu0 %v1277
    %1551 = vmatmul.mubr.bf16.gmra.mrb[0].mxu0 %v1276
    %v1552 = vpop.f32.mrb[0].mxu0
    %v1553 = vadd.f32 %v919, %v1552
    %v1554 = vpop.f32.mrb[0].mxu0
    %v1555 = vpop.f32.mrb[0].mxu0
    %v1556 = vadd.f32 %v924, %v1555
    %v1557 = vpop.f32.mrb[0].mxu0
    %1558 = vmatprep.mubr.bf16.mxu0 %v1279
    %1559 = vmatmul.mubr.bf16.gmra.mrb[0].mxu0 %v1278
    %v1560 = vpop.f32.mrb[0].mxu0
    %v1561 = vadd.f32 %v929, %v1560
    %v1562 = vpop.f32.mrb[0].mxu0
    %v1563 = vpop.f32.mrb[0].mxu0
    %v1564 = vadd.f32 %v934, %v1563
    %v1565 = vpop.f32.mrb[0].mxu0
    %1566 = vmatprep.mubr.bf16.mxu0 %v1281
    %1567 = vmatmul.mubr.bf16.gmra.mrb[0].mxu0 %v1280
    %v1568 = vpop.f32.mrb[0].mxu0
    %v1569 = vadd.f32 %v939, %v1568
    %v1570 = vpop.f32.mrb[0].mxu0
    %v1571 = vpop.f32.mrb[0].mxu0
    %v1572 = vadd.f32 %v944, %v1571
    %v1573 = vpop.f32.mrb[0].mxu0
    %1574 = vmatprep.mubr.bf16.mxu0 %v1283
    %1575 = vmatmul.mubr.bf16.gmra.mrb[0].mxu0 %v1282
    %v1576 = vpop.f32.mrb[0].mxu0
    %v1577 = vadd.f32 %v949, %v1576
    %v1578 = vpop.f32.mrb[0].mxu0
    %v1579 = vpop.f32.mrb[0].mxu0
    %v1580 = vadd.f32 %v954, %v1579
    %v1581 = vpop.f32.mrb[0].mxu0
    %1582 = vmatprep.mubr.bf16.mxu0 %v1285
    %1583 = vmatmul.mubr.bf16.gmra.mrb[0].mxu0 %v1284
    %v1584 = vpop.f32.mrb[0].mxu0
    %v1585 = vadd.f32 %v959, %v1584
    %v1586 = vpop.f32.mrb[0].mxu0
    %v1587 = vpop.f32.mrb[0].mxu0
    %v1588 = vadd.f32 %v964, %v1587
    %v1589 = vpop.f32.mrb[0].mxu0
    %1590 = vmatprep.mubr.bf16.mxu0 %v1287
    %1591 = vmatmul.mubr.bf16.gmra.mrb[0].mxu0 %v1286
    %v1592 = vpop.f32.mrb[0].mxu0
    %v1593 = vadd.f32 %v969, %v1592
    %v1594 = vpop.f32.mrb[0].mxu0
    %v1595 = vpop.f32.mrb[0].mxu0
    %v1596 = vadd.f32 %v974, %v1595
    %v1597 = vpop.f32.mrb[0].mxu0
    %1598 = vmatprep.mubr.bf16.mxu0 %v1289
    %1599 = vmatmul.mubr.bf16.gmra.mrb[0].mxu0 %v1288
    %v1600 = vpop.f32.mrb[0].mxu0
    %v1601 = vadd.f32 %v979, %v1600
    %v1602 = vpop.f32.mrb[0].mxu0
    %v1603 = vpop.f32.mrb[0].mxu0
    %v1604 = vadd.f32 %v984, %v1603
    %v1605 = vpop.f32.mrb[0].mxu0
    %1606 = vmatprep.mubr.bf16.mxu0 %v1291
    %1607 = vmatmul.mubr.bf16.gmra.mrb[0].mxu0 %v1290
    %v1608 = vpop.f32.mrb[0].mxu0
    %v1609 = vadd.f32 %v989, %v1608
    %v1610 = vpop.f32.mrb[0].mxu0
    %v1611 = vpop.f32.mrb[0].mxu0
    %v1612 = vadd.f32 %v994, %v1611
    %v1613 = vpop.f32.mrb[0].mxu0
    %1614 = vmatprep.mubr.bf16.mxu0 %v1293
    %1615 = vmatmul.mubr.bf16.gmra.mrb[0].mxu0 %v1292
    %v1616 = vpop.f32.mrb[0].mxu0
    %v1617 = vadd.f32 %v999, %v1616
    %v1618 = vpop.f32.mrb[0].mxu0
    %v1619 = vpop.f32.mrb[0].mxu0
    %v1620 = vadd.f32 %v1004, %v1619
    %v1621 = vpop.f32.mrb[0].mxu0
    %1622 = vmatprep.mubr.bf16.mxu0 %v1295
    %1623 = vmatmul.mubr.bf16.gmra.mrb[0].mxu0 %v1294
    %v1624 = vpop.f32.mrb[0].mxu0
    %v1625 = vadd.f32 %v1009, %v1624
    %v1626 = vpop.f32.mrb[0].mxu0
    %v1627 = vpop.f32.mrb[0].mxu0
    %v1628 = vadd.f32 %v1014, %v1627
    %v1629 = vpop.f32.mrb[0].mxu0
    %1630 = vmatprep.mubr.bf16.mxu0 %v1297
    %1631 = vmatmul.mubr.bf16.gmra.mrb[0].mxu0 %v1296
    %v1632 = vpop.f32.mrb[0].mxu0
    %v1633 = vadd.f32 %v1019, %v1632
    %v1634 = vpop.f32.mrb[0].mxu0
    %v1635 = vpop.f32.mrb[0].mxu0
    %v1636 = vadd.f32 %v1024, %v1635
    %v1637 = vpop.f32.mrb[0].mxu0
    %1638 = vmatprep.mubr.bf16.mxu0 %v1299
    %1639 = vmatmul.mubr.bf16.gmra.mrb[0].mxu0 %v1298
    %v1640 = vpop.f32.mrb[0].mxu0
    %v1641 = vadd.f32 %v1029, %v1640
    %v1642 = vpop.f32.mrb[0].mxu0
    %v1643 = vpop.f32.mrb[0].mxu0
    %v1644 = vadd.f32 %v1034, %v1643
    %v1645 = vpop.f32.mrb[0].mxu0
    %1646 = vmatprep.mubr.bf16.mxu0 %v1301
    %1647 = vmatmul.mubr.bf16.gmra.mrb[0].mxu0 %v1300
    %v1648 = vpop.f32.mrb[0].mxu0
    %v1649 = vadd.f32 %v1039, %v1648
    %v1650 = vpop.f32.mrb[0].mxu0
    %v1651 = vpop.f32.mrb[0].mxu0
    %v1652 = vadd.f32 %v1044, %v1651
    %v1653 = vpop.f32.mrb[0].mxu0
    %1654 = vdwg.mxu0
    %v1655 = vmax.f32 %v1401, 0.0
    %v1656 = vmax.f32 %v1404, 0.0
    %v1657 = vmax.f32 %v1409, 0.0
    %v1658 = vmax.f32 %v1412, 0.0
    %v1659 = vmax.f32 %v1417, 0.0
    %v1660 = vmax.f32 %v1420, 0.0
    %v1661 = vmax.f32 %v1425, 0.0
    %v1662 = vmax.f32 %v1428, 0.0
    %v1663 = vmax.f32 %v1433, 0.0
    %v1664 = vmax.f32 %v1436, 0.0
    %v1665 = vmax.f32 %v1441, 0.0
    %v1666 = vmax.f32 %v1444, 0.0
    %v1667 = vmax.f32 %v1449, 0.0
    %v1668 = vmax.f32 %v1452, 0.0
    %v1669 = vmax.f32 %v1457, 0.0
    %v1670 = vmax.f32 %v1460, 0.0
    %v1671 = vmax.f32 %v1465, 0.0
    %v1672 = vmax.f32 %v1468, 0.0
    %v1673 = vmax.f32 %v1473, 0.0
    %v1674 = vmax.f32 %v1476, 0.0
    %v1675 = vmax.f32 %v1481, 0.0
    %v1676 = vmax.f32 %v1484, 0.0
    %v1677 = vmax.f32 %v1489, 0.0
    %v1678 = vmax.f32 %v1492, 0.0
    %v1679 = vmax.f32 %v1497, 0.0
    %v1680 = vmax.f32 %v1500, 0.0
    %v1681 = vmax.f32 %v1505, 0.0
    %v1682 = vmax.f32 %v1508, 0.0
    %v1683 = vmax.f32 %v1513, 0.0
    %v1684 = vmax.f32 %v1516, 0.0
    %v1685 = vmax.f32 %v1521, 0.0
    %v1686 = vmax.f32 %v1524, 0.0
    %v1687 = vmax.f32 %v1529, 0.0
    %v1688 = vmax.f32 %v1532, 0.0
    %v1689 = vmax.f32 %v1537, 0.0
    %v1690 = vmax.f32 %v1540, 0.0
    %v1691 = vmax.f32 %v1545, 0.0
    %v1692 = vmax.f32 %v1548, 0.0
    %v1693 = vmax.f32 %v1553, 0.0
    %v1694 = vmax.f32 %v1556, 0.0
    %v1695 = vmax.f32 %v1561, 0.0
    %v1696 = vmax.f32 %v1564, 0.0
    %v1697 = vmax.f32 %v1569, 0.0
    %v1698 = vmax.f32 %v1572, 0.0
    %v1699 = vmax.f32 %v1577, 0.0
    %v1700 = vmax.f32 %v1580, 0.0
    %v1701 = vmax.f32 %v1585, 0.0
    %v1702 = vmax.f32 %v1588, 0.0
    %v1703 = vmax.f32 %v1593, 0.0
    %v1704 = vmax.f32 %v1596, 0.0
    %v1705 = vmax.f32 %v1601, 0.0
    %v1706 = vmax.f32 %v1604, 0.0
    %v1707 = vmax.f32 %v1609, 0.0
    %v1708 = vmax.f32 %v1612, 0.0
    %v1709 = vmax.f32 %v1617, 0.0
    %v1710 = vmax.f32 %v1620, 0.0
    %v1711 = vmax.f32 %v1625, 0.0
    %v1712 = vmax.f32 %v1628, 0.0
    %v1713 = vmax.f32 %v1633, 0.0
    %v1714 = vmax.f32 %v1636, 0.0
    %v1715 = vmax.f32 %v1641, 0.0
    %v1716 = vmax.f32 %v1644, 0.0
    %v1717 = vmax.f32 %v1649, 0.0
    %v1718 = vmax.f32 %v1652, 0.0
    %v1719 = vpack.c.bf16 %v1656, %v1655
    %v1720 = vpack.c.bf16 %v1658, %v1657
    %v1721 = vpack.c.bf16 %v1660, %v1659
    %v1722 = vpack.c.bf16 %v1662, %v1661
    %v1723 = vpack.c.bf16 %v1664, %v1663
    %v1724 = vpack.c.bf16 %v1666, %v1665
    %v1725 = vpack.c.bf16 %v1668, %v1667
    %v1726 = vpack.c.bf16 %v1670, %v1669
    %v1727 = vpack.c.bf16 %v1672, %v1671
    %v1728 = vpack.c.bf16 %v1674, %v1673
    %v1729 = vpack.c.bf16 %v1676, %v1675
    %v1730 = vpack.c.bf16 %v1678, %v1677
    %v1731 = vpack.c.bf16 %v1680, %v1679
    %v1732 = vpack.c.bf16 %v1682, %v1681
    %v1733 = vpack.c.bf16 %v1684, %v1683
    %v1734 = vpack.c.bf16 %v1686, %v1685
    %v1735 = vpack.c.bf16 %v1688, %v1687
    %v1736 = vpack.c.bf16 %v1690, %v1689
    %v1737 = vpack.c.bf16 %v1692, %v1691
    %v1738 = vpack.c.bf16 %v1694, %v1693
    %v1739 = vpack.c.bf16 %v1696, %v1695
    %v1740 = vpack.c.bf16 %v1698, %v1697
    %v1741 = vpack.c.bf16 %v1700, %v1699
    %v1742 = vpack.c.bf16 %v1702, %v1701
    %v1743 = vpack.c.bf16 %v1704, %v1703
    %v1744 = vpack.c.bf16 %v1706, %v1705
    %v1745 = vpack.c.bf16 %v1708, %v1707
    %v1746 = vpack.c.bf16 %v1710, %v1709
    %v1747 = vpack.c.bf16 %v1712, %v1711
    %v1748 = vpack.c.bf16 %v1714, %v1713
    %v1749 = vpack.c.bf16 %v1716, %v1715
    %v1750 = vpack.c.bf16 %v1718, %v1717
    %v1751 = vld [vmem:[%s5] sm:$0xf]
    %v1752 = vld [vmem:[#allocation2] sm:$0x1]
    %1754 = vset.pattern.permute.xlu0 0
    %1755 = vperm.xlu0 %1754, %v1752
    %v1756 = vpop.permute.xlu0 %1755
    %v1758 = vlaneseq
    %v1759 = vshrl.u32 %v1758, 7
    %v1760 = vsub.s32 0, %v1759
    %v1761 = vrot.slane %v1756, %v1760
    %v1764 = vunpack.c.l.s4 1966171168
    %v1765 = vunpack.c.0.s8 %v1764
    %v1766 = vlaneseq
    %v1767 = vshrl.u32 %v1766, 7
    %v1768 = vsub.s32 %v1765, %v1767
    %v1769 = vrot.slane %v1751, %v1768
    %v1770 = vcombine.high %v1769, %v1769
    %v1772 = vunpack.c.l.s4 1966171168
    %v1773 = vunpack.c.0.s8 %v1772
    %v1774 = vlaneseq
    %v1775 = vshrl.u32 %v1774, 7
    %v1776 = vsub.s32 %v1773, %v1775
    %v1777 = vrot.slane %v1769, %v1776
    %v1779 = vunpack.c.l.s4 1966171168
    %v1780 = vunpack.c.0.s8 %v1779
    %v1781 = vlaneseq
    %v1782 = vshrl.u32 %v1781, 7
    %v1783 = vsub.s32 %v1780, %v1782
    %v1784 = vrot.slane %v1770, %v1783
    %v1785 = vcombine.high %v1777, %v1777
    %v1786 = vcombine.high %v1784, %v1784
    %1791 = vmatprep.subr.bf16.mxu0 0
    %1792 = vmatpush1.bf16.msra.mxu0 %v1719
    %1793 = vmatprep.subr.bf16.mxu0 0
    %1794 = vmatpush1.bf16.msra.mxu0 %v1720
    %1795 = vmatprep.subr.bf16.mxu0 0
    %1796 = vmatpush1.bf16.msra.mxu0 %v1721
    %1797 = vmatprep.subr.bf16.mxu0 0
    %1798 = vmatpush1.bf16.msra.mxu0 %v1722
    %1799 = vmatprep.subr.bf16.mxu0 0
    %1800 = vmatpush1.bf16.msra.mxu0 %v1723
    %1801 = vmatprep.subr.bf16.mxu0 0
    %1802 = vmatpush1.bf16.msra.mxu0 %v1724
    %1803 = vmatprep.subr.bf16.mxu0 0
    %1804 = vmatpush1.bf16.msra.mxu0 %v1725
    %1805 = vmatprep.subr.bf16.mxu0 0
    %1806 = vmatpush1.bf16.msra.mxu0 %v1726
    %1807 = vmatprep.subr.bf16.mxu0 0
    %1808 = vmatpush1.bf16.msra.mxu0 %v1727
    %1809 = vmatprep.subr.bf16.mxu0 0
    %1810 = vmatpush1.bf16.msra.mxu0 %v1728
    %1811 = vmatprep.subr.bf16.mxu0 0
    %1812 = vmatpush1.bf16.msra.mxu0 %v1729
    %1813 = vmatprep.subr.bf16.mxu0 0
    %1814 = vmatpush1.bf16.msra.mxu0 %v1730
    %1815 = vmatprep.subr.bf16.mxu0 0
    %1816 = vmatpush1.bf16.msra.mxu0 %v1731
    %1817 = vmatprep.subr.bf16.mxu0 0
    %1818 = vmatpush1.bf16.msra.mxu0 %v1732
    %1819 = vmatprep.subr.bf16.mxu0 0
    %1820 = vmatpush1.bf16.msra.mxu0 %v1733
    %1821 = vmatprep.subr.bf16.mxu0 0
    %1822 = vmatpush1.bf16.msra.mxu0 %v1734
    %1823 = vmatprep.mubr.bf16.mxu0 %v1784
    %1824 = vmatmul.mubr.bf16.gmra.mrb[0].mxu0 %v1777
    %v1825 = vpop.f32.mrb[0].mxu0
    %v1826 = vadd.f32 %v1761, %v1825
    %v1827 = vpop.f32.mrb[0].mxu0
    %v1828 = vpop.f32.mrb[0].mxu0
    %v1829 = vpop.f32.mrb[0].mxu0
    %1830 = vdwg.mxu0
    %1831 = vmatprep.subr.bf16.mxu0 0
    %1832 = vmatpush1.bf16.msra.mxu0 %v1735
    %1833 = vmatprep.subr.bf16.mxu0 0
    %1834 = vmatpush1.bf16.msra.mxu0 %v1736
    %1835 = vmatprep.subr.bf16.mxu0 0
    %1836 = vmatpush1.bf16.msra.mxu0 %v1737
    %1837 = vmatprep.subr.bf16.mxu0 0
    %1838 = vmatpush1.bf16.msra.mxu0 %v1738
    %1839 = vmatprep.subr.bf16.mxu0 0
    %1840 = vmatpush1.bf16.msra.mxu0 %v1739
    %1841 = vmatprep.subr.bf16.mxu0 0
    %1842 = vmatpush1.bf16.msra.mxu0 %v1740
    %1843 = vmatprep.subr.bf16.mxu0 0
    %1844 = vmatpush1.bf16.msra.mxu0 %v1741
    %1845 = vmatprep.subr.bf16.mxu0 0
    %1846 = vmatpush1.bf16.msra.mxu0 %v1742
    %1847 = vmatprep.subr.bf16.mxu0 0
    %1848 = vmatpush1.bf16.msra.mxu0 %v1743
    %1849 = vmatprep.subr.bf16.mxu0 0
    %1850 = vmatpush1.bf16.msra.mxu0 %v1744
    %1851 = vmatprep.subr.bf16.mxu0 0
    %1852 = vmatpush1.bf16.msra.mxu0 %v1745
    %1853 = vmatprep.subr.bf16.mxu0 0
    %1854 = vmatpush1.bf16.msra.mxu0 %v1746
    %1855 = vmatprep.subr.bf16.mxu0 0
    %1856 = vmatpush1.bf16.msra.mxu0 %v1747
    %1857 = vmatprep.subr.bf16.mxu0 0
    %1858 = vmatpush1.bf16.msra.mxu0 %v1748
    %1859 = vmatprep.subr.bf16.mxu0 0
    %1860 = vmatpush1.bf16.msra.mxu0 %v1749
    %1861 = vmatprep.subr.bf16.mxu0 0
    %1862 = vmatpush1.bf16.msra.mxu0 %v1750
    %1863 = vmatprep.mubr.bf16.mxu0 %v1786
    %1864 = vmatmul.mubr.bf16.gmra.mrb[0].mxu0 %v1785
    %v1865 = vpop.f32.mrb[0].mxu0
    %v1866 = vadd.f32 %v1826, %v1865
    %v1867 = vpop.f32.mrb[0].mxu0
    %v1868 = vpop.f32.mrb[0].mxu0
    %v1869 = vpop.f32.mrb[0].mxu0
    %1870 = vdwg.mxu0
    %1871 = vst [vmem:[#allocation3] sm:$0x1] %v1866
    // Predicated region
    $region30: #{tpu_custom_call.1} parent=1 // pred_check
      _
    $region31: #{tpu_custom_call.1} parent=1 // pred_check_branch
      %1873 = sbr.rel (0) target = $region33
    $region32: #{tpu_custom_call.1} parent=1 // pred_region
      %s1875 = ssub.s32 16, 16
      %1876 = vsyncadd [#allocation4], %s1875
      %s1878 = sshll.u32 [#allocation3], 4
      %s1879 = int_to_ptr.vmem [resolvable:$true] %s1878
      %1881 = dma.vmem_to_hbm [thread:$0]  %s1879, 16, %s7, [#allocation4]
    $region33: #{tpu_custom_call.1} parent=1 // pred_fallthru
      _
    // Predicated region
    $region34: #{tpu_custom_call.1} parent=1 // pred_check
      _
    $region35: #{tpu_custom_call.1} parent=1 // pred_check_branch
      %1883 = sbr.rel (0) target = $region37
    $region36: #{tpu_custom_call.1} parent=1 // pred_region
      %1884 = dma.done [#allocation4], 16
    $region37: #{tpu_custom_call.1} parent=1 // pred_fallthru
      _
    %1885 = vsyncpa [#allocation4], 1

</llo_original>
